<compile_context>
chip_gen: v6e
topology: v6e:2x2x1
jax: 0.10.0
libtpu: 0.0.40
codegen_flags: <defaults>
</compile_context>

<pallas_src>
import functools

import numpy as np
import jax
import jax.numpy as jnp
from jax import lax
from jax.experimental import pallas as pl
from jax.experimental.pallas import tpu as pltpu

NEG_BIG = -1e30  # stands in for -inf in the causal mask (diagonal never masked)


def _encoder_kernel(his_ref, pos_ref, intv_ref, len_ref,
                    wqkv_ref, bqkv_ref,
                    pemb_ref, pvemb_ref, temb_ref, tvemb_ref,
                    ln1g_ref, ln1b_ref,
                    w1_ref, b1_ref, w2_ref, b2_ref,
                    ln2g_ref, ln2b_ref,
                    out_ref, *, compute_dtype):
    BB, S, E = his_ref.shape
    H1 = pemb_ref.shape[0]          # max_his + 1
    T1 = temb_ref.shape[0]          # max_time + 1
    cdt = compute_dtype
    f32 = jnp.float32

    seq = his_ref[...]                                        # (BB, S, E) f32
    seq2d = seq.reshape(BB * S, E)

    # ---- fused Q/K/V projection: one (BB*S, E) @ (E, 3E) MXU matmul ----
    qkv = jnp.dot(seq2d.astype(cdt), wqkv_ref[...].astype(cdt),
                  preferred_element_type=f32) + bqkv_ref[...]  # (BB*S, 3E)
    q2d = qkv[:, 0 * E:1 * E]
    q = q2d.reshape(BB, S, E)
    k = qkv[:, 1 * E:2 * E].reshape(BB, S, E)
    v = qkv[:, 2 * E:3 * E].reshape(BB, S, E)

    # ---- positional embedding gather as exact one-hot matmuls (f32) ----
    pos_oh = (pos_ref[...] ==
              lax.broadcasted_iota(jnp.int32, (BB, S, H1), 2)).astype(f32)
    pos_oh2d = pos_oh.reshape(BB * S, H1)
    pos_k = jnp.dot(pos_oh2d, pemb_ref[...],
                    preferred_element_type=f32).reshape(BB, S, E)
    pos_v = jnp.dot(pos_oh2d, pvemb_ref[...],
                    preferred_element_type=f32).reshape(BB, S, E)
    k = k + pos_k
    v = v + pos_v

    # ---- attention scores: content term (batched MXU matmul) ----
    scores = jnp.einsum('bqe,bke->bqk', q.astype(cdt), k.astype(cdt),
                        preferred_element_type=f32)            # (BB, S, S)

    # ---- time-interval key term via the small (T1, E) table ----
    # qt[b,q,t] = q[b,q,:] . t_emb[t,:]
    qt = jnp.einsum('ne,te->nt', q2d.astype(cdt), temb_ref[...].astype(cdt),
                    preferred_element_type=f32).reshape(BB, S, T1)
    intv_oh = (intv_ref[...][..., None] ==
               lax.broadcasted_iota(jnp.int32, (BB, S, S, T1), 3)).astype(f32)
    # select qt at interval[b,q,k] (exact one-hot reduce over the tiny T1 axis)
    scores = scores + jnp.sum(intv_oh * qt[:, :, None, :], axis=-1)

    scores = scores * jnp.float32(1.0 / (float(E) ** 0.5))

    # causal mask
    row = lax.broadcasted_iota(jnp.int32, (BB, S, S), 1)
    col = lax.broadcasted_iota(jnp.int32, (BB, S, S), 2)
    scores = jnp.where(row >= col, scores, jnp.float32(NEG_BIG))

    # softmax in f32; approximate reciprocal runs on the EUP slot
    smax = jnp.max(scores, axis=-1, keepdims=True)
    p = jnp.exp(scores - smax)
    probs = p * pl.reciprocal(jnp.sum(p, axis=-1, keepdims=True), approx=True)

    # ---- attention output: content term + interval value term ----
    attn = jnp.einsum('bqk,bke->bqe', probs.astype(cdt), v.astype(cdt),
                      preferred_element_type=f32)              # (BB, S, E)
    # bucket[b,q,t] = sum_k probs[b,q,k] * onehot(interval[b,q,k])[t]
    bucket = jnp.sum(probs[..., None] * intv_oh, axis=2)       # (BB, S, T1)
    attn = attn + jnp.dot(bucket.reshape(BB * S, T1).astype(cdt),
                          tvemb_ref[...].astype(cdt),
                          preferred_element_type=f32).reshape(BB, S, E)

    # ---- residual + LayerNorm 1 (f32) ----
    x = attn + seq
    mu = jnp.mean(x, axis=-1, keepdims=True)
    var = jnp.mean((x - mu) ** 2, axis=-1, keepdims=True)
    ctx = (x - mu) * lax.rsqrt(var + jnp.float32(1e-5)) * ln1g_ref[...] + ln1b_ref[...]

    # ---- position-wise FFN (d_ff == E), on the (BB*S, E) slab ----
    ctx2d = ctx.reshape(BB * S, E)
    h = jnp.dot(ctx2d.astype(cdt), w1_ref[...].astype(cdt),
                preferred_element_type=f32) + b1_ref[...]
    h = jnp.maximum(h, 0.0)
    h = jnp.dot(h.astype(cdt), w2_ref[...].astype(cdt),
                preferred_element_type=f32) + b2_ref[...]
    y = h.reshape(BB, S, E) + ctx

    # ---- residual + LayerNorm 2 (f32) ----
    mu2 = jnp.mean(y, axis=-1, keepdims=True)
    var2 = jnp.mean((y - mu2) ** 2, axis=-1, keepdims=True)
    y = (y - mu2) * lax.rsqrt(var2 + jnp.float32(1e-5)) * ln2g_ref[...] + ln2b_ref[...]

    # ---- pick row lengths-1 for each of the BB batch rows ----
    # (the selected row is always valid for lengths>=1; lengths==0 yields an
    #  all-zero row, matching the reference where the valid mask zeroes it)
    sel = (lax.broadcasted_iota(jnp.int32, (BB, S, 1), 1) ==
           (len_ref[...] - 1)).astype(f32)                     # (BB, S, 1)
    out_ref[...] = jnp.sum(y * sel, axis=1, keepdims=True)     # (BB, 1, E)


def tisasrec_encoder(params, his_vectors, lengths, valid_his, t_history, user_min_t,
                     *, max_his, max_time, block_b=8, compute_dtype=jnp.bfloat16):
    """TiSASRecEncoder.forward (1 head, 1 layer, dropout=0, kq_same=False)."""
    B, S, E = his_vectors.shape
    lengths = lengths.astype(jnp.int32)

    # batch tile: BB sequences per grid step (amortize per-step overhead / fill MXU)
    bb = max(1, min(block_b, B))
    while B % bb:
        bb -= 1

    # ---- cheap integer index computations stay in JAX glue ----
    len_range = jnp.arange(S, dtype=jnp.int32)
    position = (lengths[:, None] - len_range[None, :]) * valid_his.astype(jnp.int32)  # (B,S)
    min_t = jnp.maximum(user_min_t.astype(jnp.float32), 1.0)   # guard div-by-zero
    diff = jnp.abs(t_history[:, :, None] - t_history[:, None, :]).astype(jnp.float32)
    interval = jnp.clip((diff / min_t[:, None, None]).astype(jnp.int32), 0, max_time)  # (B,S,S)

    # fused QKV weights/biases -> one MXU matmul per step
    wqkv = jnp.concatenate([params["wq"], params["wk"], params["wv"]], axis=1)  # (E,3E)
    bqkv = jnp.concatenate([params["bq"], params["bk"], params["bv"]], axis=1)  # (1,3E)

    seq_spec = pl.BlockSpec((bb, S, E), lambda i: (i, 0, 0))
    pos_spec = pl.BlockSpec((bb, S, 1), lambda i: (i, 0, 0))
    intv_spec = pl.BlockSpec((bb, S, S), lambda i: (i, 0, 0))
    len_spec = pl.BlockSpec((bb, 1, 1), lambda i: (i, 0, 0))

    def full(a):  # resident parameter block (same block every grid step)
        nd = a.ndim
        return pl.BlockSpec(a.shape, lambda i, _nd=nd: (0,) * _nd)

    in_specs = [seq_spec, pos_spec, intv_spec, len_spec,
                full(wqkv), full(bqkv),
                full(params["p_emb"]), full(params["p_v_emb"]),
                full(params["t_emb"]), full(params["t_v_emb"]),
                full(params["ln1_g"]), full(params["ln1_b"]),
                full(params["w1"]), full(params["b1"]),
                full(params["w2"]), full(params["b2"]),
                full(params["ln2_g"]), full(params["ln2_b"])]
    out_spec = pl.BlockSpec((bb, 1, E), lambda i: (i, 0, 0))

    kernel = functools.partial(_encoder_kernel, compute_dtype=compute_dtype)

    out = pl.pallas_call(
        kernel,
        out_shape=jax.ShapeDtypeStruct((B, 1, E), jnp.float32),
        grid_spec=pltpu.PrefetchScalarGridSpec(
            num_scalar_prefetch=0,
            grid=(B // bb,),
            in_specs=in_specs,
            out_specs=out_spec),
        compiler_params=pltpu.CompilerParams(
            dimension_semantics=("parallel",)),   # no cross-batch carry -> megacore OK
    )(his_vectors.astype(jnp.float32),
      position[:, :, None].astype(jnp.int32),
      interval.astype(jnp.int32),
      lengths[:, None, None],
      wqkv, bqkv,
      params["p_emb"], params["p_v_emb"], params["t_emb"], params["t_v_emb"],
      params["ln1_g"], params["ln1_b"],
      params["w1"], params["b1"], params["w2"], params["b2"],
      params["ln2_g"], params["ln2_b"])
    return out[:, 0, :]


def intent_predictor_forward(params, history, lengths, t_history, user_min_t,
                             *, max_his, max_time, compute_dtype=jnp.bfloat16):
    """IntentPredictor.forward with predictor='TiSASRec'."""
    valid_his = (history > 0).astype(jnp.int32)
    # TODO(synk): large item-embedding-table gather stays in JAX glue (jnp.take).
    his_vectors = jnp.take(params["i_emb"], history, axis=0)
    return tisasrec_encoder(params, his_vectors, lengths, valid_his, t_history,
                            user_min_t, max_his=max_his, max_time=max_time,
                            compute_dtype=compute_dtype)


def init_params(key, item_num, emb_size, max_his, max_time):
    E = emb_size
    ks = jax.random.split(key, 13)
    nrm = lambda k, shape: 0.05 * jax.random.normal(k, shape, dtype=jnp.float32)
    return {
        "i_emb":   nrm(ks[0], (item_num + 1, E)),
        "p_emb":   nrm(ks[1], (max_his + 1, E)),
        "p_v_emb": nrm(ks[2], (max_his + 1, E)),
        "t_emb":   nrm(ks[3], (max_time + 1, E)),
        "t_v_emb": nrm(ks[4], (max_time + 1, E)),
        "wq": nrm(ks[5], (E, E)), "bq": nrm(ks[6], (1, E)),
        "wk": nrm(ks[7], (E, E)), "bk": nrm(ks[8], (1, E)),
        "wv": nrm(ks[9], (E, E)), "bv": nrm(ks[10], (1, E)),
        "ln1_g": jnp.ones((1, E), jnp.float32), "ln1_b": jnp.zeros((1, E), jnp.float32),
        "w1": nrm(ks[11], (E, E)), "b1": jnp.zeros((1, E), jnp.float32),
        "w2": nrm(ks[12], (E, E)), "b2": jnp.zeros((1, E), jnp.float32),
        "ln2_g": jnp.ones((1, E), jnp.float32), "ln2_b": jnp.zeros((1, E), jnp.float32),
    }


def reference(params, history, lengths, t_history, user_min_t, *, max_his, max_time):
    """Pure-JAX f32 mirror of the PyTorch forward (dropout=0, 1 head, 1 layer)."""
    B, S = history.shape
    E = params["i_emb"].shape[1]
    valid_his = (history > 0).astype(jnp.int32)
    seq = params["i_emb"][history]

    position = (lengths[:, None] - jnp.arange(S)[None, :]) * valid_his
    pos_k = params["p_emb"][position]
    pos_v = params["p_v_emb"][position]
    min_t = jnp.maximum(user_min_t.astype(jnp.float32), 1.0)
    diff = jnp.abs(t_history[:, :, None] - t_history[:, None, :]).astype(jnp.float32)
    interval = jnp.clip((diff / min_t[:, None, None]).astype(jnp.int32), 0, max_time)
    inter_k = params["t_emb"][interval]
    inter_v = params["t_v_emb"][interval]

    q = seq @ params["wq"] + params["bq"]
    k = seq @ params["wk"] + params["bk"] + pos_k
    v = seq @ params["wv"] + params["bv"] + pos_v
    scores = jnp.einsum("bqe,bke->bqk", q, k) + jnp.einsum("bqe,bqke->bqk", q, inter_k)
    scores = scores / (E ** 0.5)
    mask = jnp.tril(jnp.ones((S, S), dtype=bool))
    scores = jnp.where(mask[None], scores, NEG_BIG)
    probs = jax.nn.softmax(scores, axis=-1)
    attn = jnp.einsum("bqk,bke->bqe", probs, v) + jnp.einsum("bqk,bqke->bqe", probs, inter_v)

    def ln(x, g, bt):
        mu = x.mean(-1, keepdims=True)
        var = ((x - mu) ** 2).mean(-1, keepdims=True)
        return (x - mu) / jnp.sqrt(var + 1e-5) * g + bt

    ctx = ln(attn + seq, params["ln1_g"], params["ln1_b"])
    h = jnp.maximum(ctx @ params["w1"] + params["b1"], 0.0) @ params["w2"] + params["b2"]
    y = ln(h + ctx, params["ln2_g"], params["ln2_b"])
    y = y * valid_his[:, :, None].astype(jnp.float32)
    return y[jnp.arange(B), lengths - 1, :]


if __name__ == "__main__":
    B, S, E = 2, 8, 32
    item_num, max_his, max_time = 50, 8, 16

    key = jax.random.PRNGKey(0)
    kp, kh, kt = jax.random.split(key, 3)
    params = init_params(kp, item_num, E, max_his, max_time)

    lengths = jnp.array([5, 8], dtype=jnp.int32)
    valid = (jnp.arange(S)[None, :] < lengths[:, None])
    history = (jax.random.randint(kh, (B, S), 1, item_num + 1) * valid).astype(jnp.int32)
    t_history = (jax.random.randint(kt, (B, S), 0, 100) * valid).astype(jnp.int32)
    user_min_t = jnp.array([3, 7], dtype=jnp.int32)

    ref = reference(params, history, lengths, t_history, user_min_t,
                    max_his=max_his, max_time=max_time)

    # f32 compute path: tight numerical check
    out_f32 = intent_predictor_forward(params, history, lengths, t_history, user_min_t,
                                       max_his=max_his, max_time=max_time,
                                       compute_dtype=jnp.float32)
    out_f32 = jax.block_until_ready(out_f32)
    np.testing.assert_allclose(np.asarray(out_f32), np.asarray(ref), rtol=5e-3, atol=5e-3)

    # bf16 compute path (default / fast): looser check
    out_bf16 = intent_predictor_forward(params, history, lengths, t_history, user_min_t,
                                        max_his=max_his, max_time=max_time,
                                        compute_dtype=jnp.bfloat16)
    out_bf16 = jax.block_until_ready(out_bf16)
    np.testing.assert_allclose(np.asarray(out_bf16), np.asarray(ref), rtol=2e-2, atol=2e-2)

    print("KERNEL_OK")
</pallas_src>

<mosaic_0001>
module attributes {stable_mosaic.version = 11 : i64} {
  func.func @_encoder_kernel(%arg0: i32, %arg1: memref<2x8x32xf32, #tpu.memory_space<vmem>>, %arg2: memref<2x8x1xi32, #tpu.memory_space<vmem>>, %arg3: memref<2x8x8xi32, #tpu.memory_space<vmem>>, %arg4: memref<2x1x1xi32, #tpu.memory_space<vmem>>, %arg5: memref<32x96xf32, #tpu.memory_space<vmem>>, %arg6: memref<1x96xf32, #tpu.memory_space<vmem>>, %arg7: memref<9x32xf32, #tpu.memory_space<vmem>>, %arg8: memref<9x32xf32, #tpu.memory_space<vmem>>, %arg9: memref<17x32xf32, #tpu.memory_space<vmem>>, %arg10: memref<17x32xf32, #tpu.memory_space<vmem>>, %arg11: memref<1x32xf32, #tpu.memory_space<vmem>>, %arg12: memref<1x32xf32, #tpu.memory_space<vmem>>, %arg13: memref<32x32xf32, #tpu.memory_space<vmem>>, %arg14: memref<1x32xf32, #tpu.memory_space<vmem>>, %arg15: memref<32x32xf32, #tpu.memory_space<vmem>>, %arg16: memref<1x32xf32, #tpu.memory_space<vmem>>, %arg17: memref<1x32xf32, #tpu.memory_space<vmem>>, %arg18: memref<1x32xf32, #tpu.memory_space<vmem>>, %arg19: memref<2x1x32xf32, #tpu.memory_space<vmem>>) attributes {dimension_semantics = [#tpu.dimension_semantics<parallel>], iteration_bounds = array<i64: 1>, scalar_prefetch = 0 : i64, scratch_operands = 0 : i64, tpu.core_type = #tpu.core_type<tc>, window_params = [{transform_indices = @transform_0, window_bounds = array<i64: 2, 8, 32>}, {transform_indices = @transform_1, window_bounds = array<i64: 2, 8, 1>}, {transform_indices = @transform_2, window_bounds = array<i64: 2, 8, 8>}, {transform_indices = @transform_3, window_bounds = array<i64: 2, 1, 1>}, {pipeline_mode = #tpu.pipeline_mode<synchronous>, transform_indices = @transform_4, window_bounds = array<i64: 32, 96>}, {pipeline_mode = #tpu.pipeline_mode<synchronous>, transform_indices = @transform_5, window_bounds = array<i64: 1, 96>}, {pipeline_mode = #tpu.pipeline_mode<synchronous>, transform_indices = @transform_6, window_bounds = array<i64: 9, 32>}, {pipeline_mode = #tpu.pipeline_mode<synchronous>, transform_indices = @transform_7, window_bounds = array<i64: 9, 32>}, {pipeline_mode = #tpu.pipeline_mode<synchronous>, transform_indices = @transform_8, window_bounds = array<i64: 17, 32>}, {pipeline_mode = #tpu.pipeline_mode<synchronous>, transform_indices = @transform_9, window_bounds = array<i64: 17, 32>}, {pipeline_mode = #tpu.pipeline_mode<synchronous>, transform_indices = @transform_10, window_bounds = array<i64: 1, 32>}, {pipeline_mode = #tpu.pipeline_mode<synchronous>, transform_indices = @transform_11, window_bounds = array<i64: 1, 32>}, {pipeline_mode = #tpu.pipeline_mode<synchronous>, transform_indices = @transform_12, window_bounds = array<i64: 32, 32>}, {pipeline_mode = #tpu.pipeline_mode<synchronous>, transform_indices = @transform_13, window_bounds = array<i64: 1, 32>}, {pipeline_mode = #tpu.pipeline_mode<synchronous>, transform_indices = @transform_14, window_bounds = array<i64: 32, 32>}, {pipeline_mode = #tpu.pipeline_mode<synchronous>, transform_indices = @transform_15, window_bounds = array<i64: 1, 32>}, {pipeline_mode = #tpu.pipeline_mode<synchronous>, transform_indices = @transform_16, window_bounds = array<i64: 1, 32>}, {pipeline_mode = #tpu.pipeline_mode<synchronous>, transform_indices = @transform_17, window_bounds = array<i64: 1, 32>}, {transform_indices = @transform_18, window_bounds = array<i64: 2, 1, 32>}]} {
    %c0 = arith.constant 0 : index
    %c0_0 = arith.constant 0 : index
    %c0_1 = arith.constant 0 : index
    %0 = vector.load %arg1[%c0, %c0_0, %c0_1] : memref<2x8x32xf32, #tpu.memory_space<vmem>>, vector<2x8x32xf32>
    %1 = vector.shape_cast %0 : vector<2x8x32xf32> to vector<16x32xf32>
    %c0_2 = arith.constant 0 : index
    %c0_3 = arith.constant 0 : index
    %2 = vector.load %arg5[%c0_2, %c0_3] : memref<32x96xf32, #tpu.memory_space<vmem>>, vector<32x96xf32>
    %cst = arith.constant dense<0.000000e+00> : vector<16x96xf32>
    %3 = tpu.matmul %1, %2, %cst {dimension_numbers = #tpu.dot_dimension_numbers<[1], [0], [0], [1], [0, 0, 1, 1], [], []>} : vector<16x32xf32>, vector<32x96xf32>, vector<16x96xf32> -> vector<16x96xf32>
    %c0_4 = arith.constant 0 : index
    %c0_5 = arith.constant 0 : index
    %4 = vector.load %arg6[%c0_4, %c0_5] : memref<1x96xf32, #tpu.memory_space<vmem>>, vector<1x96xf32>
    %5 = vector.broadcast %4 : vector<1x96xf32> to vector<16x96xf32>
    %6 = arith.addf %3, %5 : vector<16x96xf32>
    %7 = vector.extract_strided_slice %6 {offsets = [0, 0], sizes = [16, 32], strides = [1, 1]} : vector<16x96xf32> to vector<16x32xf32>
    %8 = vector.shape_cast %7 : vector<16x32xf32> to vector<2x8x32xf32>
    %9 = vector.extract_strided_slice %6 {offsets = [0, 32], sizes = [16, 32], strides = [1, 1]} : vector<16x96xf32> to vector<16x32xf32>
    %10 = vector.shape_cast %9 : vector<16x32xf32> to vector<2x8x32xf32>
    %11 = vector.extract_strided_slice %6 {offsets = [0, 64], sizes = [16, 32], strides = [1, 1]} : vector<16x96xf32> to vector<16x32xf32>
    %12 = vector.shape_cast %11 : vector<16x32xf32> to vector<2x8x32xf32>
    %c0_6 = arith.constant 0 : index
    %c0_7 = arith.constant 0 : index
    %c0_8 = arith.constant 0 : index
    %13 = vector.load %arg2[%c0_6, %c0_7, %c0_8] : memref<2x8x1xi32, #tpu.memory_space<vmem>>, vector<2x8x1xi32>
    %14 = tpu.iota {dimensions = array<i32: 2>} : vector<2x8x9xi32>
    %15 = vector.broadcast %13 : vector<2x8x1xi32> to vector<2x8x9xi32>
    %16 = arith.cmpi eq, %15, %14 : vector<2x8x9xi32>
    %17 = arith.extui %16 : vector<2x8x9xi1> to vector<2x8x9xi32>
    %18 = arith.sitofp %17 : vector<2x8x9xi32> to vector<2x8x9xf32>
    %19 = vector.shape_cast %18 : vector<2x8x9xf32> to vector<16x9xf32>
    %c0_9 = arith.constant 0 : index
    %c0_10 = arith.constant 0 : index
    %20 = vector.load %arg7[%c0_9, %c0_10] : memref<9x32xf32, #tpu.memory_space<vmem>>, vector<9x32xf32>
    %cst_11 = arith.constant dense<0.000000e+00> : vector<16x32xf32>
    %21 = tpu.matmul %19, %20, %cst_11 {dimension_numbers = #tpu.dot_dimension_numbers<[1], [0], [0], [1], [0, 0, 1, 1], [], []>} : vector<16x9xf32>, vector<9x32xf32>, vector<16x32xf32> -> vector<16x32xf32>
    %22 = vector.shape_cast %21 : vector<16x32xf32> to vector<2x8x32xf32>
    %c0_12 = arith.constant 0 : index
    %c0_13 = arith.constant 0 : index
    %23 = vector.load %arg8[%c0_12, %c0_13] : memref<9x32xf32, #tpu.memory_space<vmem>>, vector<9x32xf32>
    %cst_14 = arith.constant dense<0.000000e+00> : vector<16x32xf32>
    %24 = tpu.matmul %19, %23, %cst_14 {dimension_numbers = #tpu.dot_dimension_numbers<[1], [0], [0], [1], [0, 0, 1, 1], [], []>} : vector<16x9xf32>, vector<9x32xf32>, vector<16x32xf32> -> vector<16x32xf32>
    %25 = vector.shape_cast %24 : vector<16x32xf32> to vector<2x8x32xf32>
    %26 = arith.addf %10, %22 : vector<2x8x32xf32>
    %27 = arith.addf %12, %25 : vector<2x8x32xf32>
    "tpu.trace_start"() <{level = 10 : i32, message = "bqe,bke->bqk"}> : () -> ()
    %cst_15 = arith.constant dense<0.000000e+00> : vector<2x8x8xf32>
    %28 = tpu.matmul %8, %26, %cst_15 {dimension_numbers = #tpu.dot_dimension_numbers<[2], [2], [1], [1], [0, 0, 0, 1, 1, 1], [0], [0]>} : vector<2x8x32xf32>, vector<2x8x32xf32>, vector<2x8x8xf32> -> vector<2x8x8xf32>
    "tpu.trace_stop"() : () -> ()
    %c0_16 = arith.constant 0 : index
    %c0_17 = arith.constant 0 : index
    %29 = vector.load %arg9[%c0_16, %c0_17] : memref<17x32xf32, #tpu.memory_space<vmem>>, vector<17x32xf32>
    "tpu.trace_start"() <{level = 10 : i32, message = "ne,te->nt"}> : () -> ()
    %cst_18 = arith.constant dense<0.000000e+00> : vector<16x17xf32>
    %30 = tpu.matmul %7, %29, %cst_18 {dimension_numbers = #tpu.dot_dimension_numbers<[1], [1], [0], [0], [0, 0, 1, 0], [], []>} : vector<16x32xf32>, vector<17x32xf32>, vector<16x17xf32> -> vector<16x17xf32>
    "tpu.trace_stop"() : () -> ()
    %31 = vector.shape_cast %30 : vector<16x17xf32> to vector<2x8x17xf32>
    %c0_19 = arith.constant 0 : index
    %c0_20 = arith.constant 0 : index
    %c0_21 = arith.constant 0 : index
    %32 = vector.load %arg3[%c0_19, %c0_20, %c0_21] : memref<2x8x8xi32, #tpu.memory_space<vmem>>, vector<2x8x8xi32>
    %33 = vector.shape_cast %32 : vector<2x8x8xi32> to vector<2x8x8x1xi32>
    %34 = tpu.iota {dimensions = array<i32: 3>} : vector<2x8x8x17xi32>
    %35 = vector.broadcast %33 : vector<2x8x8x1xi32> to vector<2x8x8x17xi32>
    %36 = arith.cmpi eq, %35, %34 : vector<2x8x8x17xi32>
    %37 = arith.extui %36 : vector<2x8x8x17xi1> to vector<2x8x8x17xi32>
    %38 = arith.sitofp %37 : vector<2x8x8x17xi32> to vector<2x8x8x17xf32>
    %39 = vector.shape_cast %31 : vector<2x8x17xf32> to vector<2x8x1x17xf32>
    %40 = vector.broadcast %39 : vector<2x8x1x17xf32> to vector<2x8x8x17xf32>
    %41 = arith.mulf %38, %40 : vector<2x8x8x17xf32>
    %cst_22 = arith.constant dense<0.000000e+00> : vector<2x8x8xf32>
    %42 = vector.multi_reduction <add>, %41, %cst_22 [3] : vector<2x8x8x17xf32> to vector<2x8x8xf32>
    %43 = arith.addf %28, %42 : vector<2x8x8xf32>
    %cst_23 = arith.constant 0.176776692 : f32
    %44 = vector.broadcast %cst_23 : f32 to vector<2x8x8xf32>
    %45 = arith.mulf %43, %44 : vector<2x8x8xf32>
    %46 = tpu.iota {dimensions = array<i32: 1>} : vector<2x8x8xi32>
    %47 = tpu.iota {dimensions = array<i32: 2>} : vector<2x8x8xi32>
    %48 = arith.cmpi sge, %46, %47 : vector<2x8x8xi32>
    %cst_24 = arith.constant -1.000000e+30 : f32
    %49 = vector.broadcast %cst_24 : f32 to vector<2x8x8xf32>
    %50 = arith.select %48, %45, %49 : vector<2x8x8xi1>, vector<2x8x8xf32>
    %cst_25 = arith.constant dense<0xFF800000> : vector<2x8xf32>
    %51 = vector.multi_reduction <maximumf>, %50, %cst_25 [2] : vector<2x8x8xf32> to vector<2x8xf32>
    %52 = vector.shape_cast %51 : vector<2x8xf32> to vector<2x8x1xf32>
    %53 = vector.broadcast %52 : vector<2x8x1xf32> to vector<2x8x8xf32>
    %54 = arith.subf %50, %53 : vector<2x8x8xf32>
    %55 = math.exp %54 : vector<2x8x8xf32>
    %cst_26 = arith.constant dense<0.000000e+00> : vector<2x8xf32>
    %56 = vector.multi_reduction <add>, %55, %cst_26 [2] : vector<2x8x8xf32> to vector<2x8xf32>
    %57 = vector.shape_cast %56 : vector<2x8xf32> to vector<2x8x1xf32>
    %58 = tpu.reciprocal %57 {approx = true} : vector<2x8x1xf32> -> vector<2x8x1xf32>
    %59 = vector.broadcast %58 : vector<2x8x1xf32> to vector<2x8x8xf32>
    %60 = arith.mulf %55, %59 : vector<2x8x8xf32>
    "tpu.trace_start"() <{level = 10 : i32, message = "bqk,bke->bqe"}> : () -> ()
    %cst_27 = arith.constant dense<0.000000e+00> : vector<2x8x32xf32>
    %61 = tpu.matmul %60, %27, %cst_27 {dimension_numbers = #tpu.dot_dimension_numbers<[2], [1], [1], [2], [0, 0, 0, 1, 1, 2], [0], [0]>} : vector<2x8x8xf32>, vector<2x8x32xf32>, vector<2x8x32xf32> -> vector<2x8x32xf32>
    "tpu.trace_stop"() : () -> ()
    %62 = vector.shape_cast %60 : vector<2x8x8xf32> to vector<2x8x8x1xf32>
    %63 = vector.broadcast %62 : vector<2x8x8x1xf32> to vector<2x8x8x17xf32>
    %64 = arith.mulf %63, %38 : vector<2x8x8x17xf32>
    %cst_28 = arith.constant dense<0.000000e+00> : vector<2x8x17xf32>
    %65 = vector.multi_reduction <add>, %64, %cst_28 [2] : vector<2x8x8x17xf32> to vector<2x8x17xf32>
    %66 = vector.shape_cast %65 : vector<2x8x17xf32> to vector<16x17xf32>
    %c0_29 = arith.constant 0 : index
    %c0_30 = arith.constant 0 : index
    %67 = vector.load %arg10[%c0_29, %c0_30] : memref<17x32xf32, #tpu.memory_space<vmem>>, vector<17x32xf32>
    %cst_31 = arith.constant dense<0.000000e+00> : vector<16x32xf32>
    %68 = tpu.matmul %66, %67, %cst_31 {dimension_numbers = #tpu.dot_dimension_numbers<[1], [0], [0], [1], [0, 0, 1, 1], [], []>} : vector<16x17xf32>, vector<17x32xf32>, vector<16x32xf32> -> vector<16x32xf32>
    %69 = vector.shape_cast %68 : vector<16x32xf32> to vector<2x8x32xf32>
    %70 = arith.addf %61, %69 : vector<2x8x32xf32>
    %71 = arith.addf %70, %0 : vector<2x8x32xf32>
    %cst_32 = arith.constant dense<0.000000e+00> : vector<2x8xf32>
    %72 = vector.multi_reduction <add>, %71, %cst_32 [2] : vector<2x8x32xf32> to vector<2x8xf32>
    %73 = vector.shape_cast %72 : vector<2x8xf32> to vector<2x8x1xf32>
    %cst_33 = arith.constant 3.200000e+01 : f32
    %74 = vector.broadcast %cst_33 : f32 to vector<2x8x1xf32>
    %75 = arith.divf %73, %74 : vector<2x8x1xf32>
    %76 = vector.broadcast %75 : vector<2x8x1xf32> to vector<2x8x32xf32>
    %77 = arith.subf %71, %76 : vector<2x8x32xf32>
    %78 = arith.mulf %77, %77 : vector<2x8x32xf32>
    %cst_34 = arith.constant dense<0.000000e+00> : vector<2x8xf32>
    %79 = vector.multi_reduction <add>, %78, %cst_34 [2] : vector<2x8x32xf32> to vector<2x8xf32>
    %80 = vector.shape_cast %79 : vector<2x8xf32> to vector<2x8x1xf32>
    %cst_35 = arith.constant 3.200000e+01 : f32
    %81 = vector.broadcast %cst_35 : f32 to vector<2x8x1xf32>
    %82 = arith.divf %80, %81 : vector<2x8x1xf32>
    %83 = vector.broadcast %75 : vector<2x8x1xf32> to vector<2x8x32xf32>
    %84 = arith.subf %71, %83 : vector<2x8x32xf32>
    %cst_36 = arith.constant 9.99999974E-6 : f32
    %85 = vector.broadcast %cst_36 : f32 to vector<2x8x1xf32>
    %86 = arith.addf %82, %85 : vector<2x8x1xf32>
    %87 = math.rsqrt %86 : vector<2x8x1xf32>
    %88 = vector.broadcast %87 : vector<2x8x1xf32> to vector<2x8x32xf32>
    %89 = arith.mulf %84, %88 : vector<2x8x32xf32>
    %c0_37 = arith.constant 0 : index
    %c0_38 = arith.constant 0 : index
    %90 = vector.load %arg11[%c0_37, %c0_38] : memref<1x32xf32, #tpu.memory_space<vmem>>, vector<1x32xf32>
    %91 = vector.shape_cast %90 : vector<1x32xf32> to vector<1x1x32xf32>
    %92 = vector.broadcast %91 : vector<1x1x32xf32> to vector<2x8x32xf32>
    %93 = arith.mulf %89, %92 : vector<2x8x32xf32>
    %c0_39 = arith.constant 0 : index
    %c0_40 = arith.constant 0 : index
    %94 = vector.load %arg12[%c0_39, %c0_40] : memref<1x32xf32, #tpu.memory_space<vmem>>, vector<1x32xf32>
    %95 = vector.shape_cast %94 : vector<1x32xf32> to vector<1x1x32xf32>
    %96 = vector.broadcast %95 : vector<1x1x32xf32> to vector<2x8x32xf32>
    %97 = arith.addf %93, %96 : vector<2x8x32xf32>
    %98 = vector.shape_cast %97 : vector<2x8x32xf32> to vector<16x32xf32>
    %c0_41 = arith.constant 0 : index
    %c0_42 = arith.constant 0 : index
    %99 = vector.load %arg13[%c0_41, %c0_42] : memref<32x32xf32, #tpu.memory_space<vmem>>, vector<32x32xf32>
    %cst_43 = arith.constant dense<0.000000e+00> : vector<16x32xf32>
    %100 = tpu.matmul %98, %99, %cst_43 {dimension_numbers = #tpu.dot_dimension_numbers<[1], [0], [0], [1], [0, 0, 1, 1], [], []>} : vector<16x32xf32>, vector<32x32xf32>, vector<16x32xf32> -> vector<16x32xf32>
    %c0_44 = arith.constant 0 : index
    %c0_45 = arith.constant 0 : index
    %101 = vector.load %arg14[%c0_44, %c0_45] : memref<1x32xf32, #tpu.memory_space<vmem>>, vector<1x32xf32>
    %102 = vector.broadcast %101 : vector<1x32xf32> to vector<16x32xf32>
    %103 = arith.addf %100, %102 : vector<16x32xf32>
    %cst_46 = arith.constant 0.000000e+00 : f32
    %104 = vector.broadcast %cst_46 : f32 to vector<16x32xf32>
    %105 = arith.maximumf %103, %104 : vector<16x32xf32>
    %c0_47 = arith.constant 0 : index
    %c0_48 = arith.constant 0 : index
    %106 = vector.load %arg15[%c0_47, %c0_48] : memref<32x32xf32, #tpu.memory_space<vmem>>, vector<32x32xf32>
    %cst_49 = arith.constant dense<0.000000e+00> : vector<16x32xf32>
    %107 = tpu.matmul %105, %106, %cst_49 {dimension_numbers = #tpu.dot_dimension_numbers<[1], [0], [0], [1], [0, 0, 1, 1], [], []>} : vector<16x32xf32>, vector<32x32xf32>, vector<16x32xf32> -> vector<16x32xf32>
    %c0_50 = arith.constant 0 : index
    %c0_51 = arith.constant 0 : index
    %108 = vector.load %arg16[%c0_50, %c0_51] : memref<1x32xf32, #tpu.memory_space<vmem>>, vector<1x32xf32>
    %109 = vector.broadcast %108 : vector<1x32xf32> to vector<16x32xf32>
    %110 = arith.addf %107, %109 : vector<16x32xf32>
    %111 = vector.shape_cast %110 : vector<16x32xf32> to vector<2x8x32xf32>
    %112 = arith.addf %111, %97 : vector<2x8x32xf32>
    %cst_52 = arith.constant dense<0.000000e+00> : vector<2x8xf32>
    %113 = vector.multi_reduction <add>, %112, %cst_52 [2] : vector<2x8x32xf32> to vector<2x8xf32>
    %114 = vector.shape_cast %113 : vector<2x8xf32> to vector<2x8x1xf32>
    %cst_53 = arith.constant 3.200000e+01 : f32
    %115 = vector.broadcast %cst_53 : f32 to vector<2x8x1xf32>
    %116 = arith.divf %114, %115 : vector<2x8x1xf32>
    %117 = vector.broadcast %116 : vector<2x8x1xf32> to vector<2x8x32xf32>
    %118 = arith.subf %112, %117 : vector<2x8x32xf32>
    %119 = arith.mulf %118, %118 : vector<2x8x32xf32>
    %cst_54 = arith.constant dense<0.000000e+00> : vector<2x8xf32>
    %120 = vector.multi_reduction <add>, %119, %cst_54 [2] : vector<2x8x32xf32> to vector<2x8xf32>
    %121 = vector.shape_cast %120 : vector<2x8xf32> to vector<2x8x1xf32>
    %cst_55 = arith.constant 3.200000e+01 : f32
    %122 = vector.broadcast %cst_55 : f32 to vector<2x8x1xf32>
    %123 = arith.divf %121, %122 : vector<2x8x1xf32>
    %124 = vector.broadcast %116 : vector<2x8x1xf32> to vector<2x8x32xf32>
    %125 = arith.subf %112, %124 : vector<2x8x32xf32>
    %cst_56 = arith.constant 9.99999974E-6 : f32
    %126 = vector.broadcast %cst_56 : f32 to vector<2x8x1xf32>
    %127 = arith.addf %123, %126 : vector<2x8x1xf32>
    %128 = math.rsqrt %127 : vector<2x8x1xf32>
    %129 = vector.broadcast %128 : vector<2x8x1xf32> to vector<2x8x32xf32>
    %130 = arith.mulf %125, %129 : vector<2x8x32xf32>
    %c0_57 = arith.constant 0 : index
    %c0_58 = arith.constant 0 : index
    %131 = vector.load %arg17[%c0_57, %c0_58] : memref<1x32xf32, #tpu.memory_space<vmem>>, vector<1x32xf32>
    %132 = vector.shape_cast %131 : vector<1x32xf32> to vector<1x1x32xf32>
    %133 = vector.broadcast %132 : vector<1x1x32xf32> to vector<2x8x32xf32>
    %134 = arith.mulf %130, %133 : vector<2x8x32xf32>
    %c0_59 = arith.constant 0 : index
    %c0_60 = arith.constant 0 : index
    %135 = vector.load %arg18[%c0_59, %c0_60] : memref<1x32xf32, #tpu.memory_space<vmem>>, vector<1x32xf32>
    %136 = vector.shape_cast %135 : vector<1x32xf32> to vector<1x1x32xf32>
    %137 = vector.broadcast %136 : vector<1x1x32xf32> to vector<2x8x32xf32>
    %138 = arith.addf %134, %137 : vector<2x8x32xf32>
    %139 = tpu.iota {dimensions = array<i32: 1>} : vector<2x8x1xi32>
    %c0_61 = arith.constant 0 : index
    %c0_62 = arith.constant 0 : index
    %c0_63 = arith.constant 0 : index
    %140 = vector.load %arg4[%c0_61, %c0_62, %c0_63] : memref<2x1x1xi32, #tpu.memory_space<vmem>>, vector<2x1x1xi32>
    %c1_i32 = arith.constant 1 : i32
    %141 = vector.broadcast %c1_i32 : i32 to vector<2x1x1xi32>
    %142 = arith.subi %140, %141 : vector<2x1x1xi32>
    %143 = vector.broadcast %142 : vector<2x1x1xi32> to vector<2x8x1xi32>
    %144 = arith.cmpi eq, %139, %143 : vector<2x8x1xi32>
    %145 = arith.extui %144 : vector<2x8x1xi1> to vector<2x8x1xi32>
    %146 = arith.sitofp %145 : vector<2x8x1xi32> to vector<2x8x1xf32>
    %147 = vector.broadcast %146 : vector<2x8x1xf32> to vector<2x8x32xf32>
    %148 = arith.mulf %138, %147 : vector<2x8x32xf32>
    %cst_64 = arith.constant dense<0.000000e+00> : vector<2x32xf32>
    %149 = vector.multi_reduction <add>, %148, %cst_64 [1] : vector<2x8x32xf32> to vector<2x32xf32>
    %150 = vector.shape_cast %149 : vector<2x32xf32> to vector<2x1x32xf32>
    %c0_65 = arith.constant 0 : index
    %c0_66 = arith.constant 0 : index
    %c0_67 = arith.constant 0 : index
    %151 = vector.load %arg19[%c0_65, %c0_66, %c0_67] : memref<2x1x32xf32, #tpu.memory_space<vmem>>, vector<2x1x32xf32>
    tpu.vector_store %arg19[%c0_65, %c0_66, %c0_67], %150 {strides = array<i32>} : memref<2x1x32xf32, #tpu.memory_space<vmem>>, vector<2x1x32xf32>,
    return
  }
  func.func @transform_0(%arg0: i32) -> (i32, i32, i32) {
    %c0_i32 = arith.constant 0 : i32
    %c0_i32_0 = arith.constant 0 : i32
    %c0_i32_1 = arith.constant 0 : i32
    return %arg0, %c0_i32, %c0_i32_0 : i32, i32, i32
  }
  func.func @transform_1(%arg0: i32) -> (i32, i32, i32) {
    %c0_i32 = arith.constant 0 : i32
    %c0_i32_0 = arith.constant 0 : i32
    %c0_i32_1 = arith.constant 0 : i32
    return %arg0, %c0_i32, %c0_i32_0 : i32, i32, i32
  }
  func.func @transform_2(%arg0: i32) -> (i32, i32, i32) {
    %c0_i32 = arith.constant 0 : i32
    %c0_i32_0 = arith.constant 0 : i32
    %c0_i32_1 = arith.constant 0 : i32
    return %arg0, %c0_i32, %c0_i32_0 : i32, i32, i32
  }
  func.func @transform_3(%arg0: i32) -> (i32, i32, i32) {
    %c0_i32 = arith.constant 0 : i32
    %c0_i32_0 = arith.constant 0 : i32
    %c0_i32_1 = arith.constant 0 : i32
    return %arg0, %c0_i32, %c0_i32_0 : i32, i32, i32
  }
  func.func @transform_4(%arg0: i32) -> (i32, i32) {
    %c0_i32 = arith.constant 0 : i32
    %c0_i32_0 = arith.constant 0 : i32
    %c0_i32_1 = arith.constant 0 : i32
    return %c0_i32, %c0_i32_0 : i32, i32
  }
  func.func @transform_5(%arg0: i32) -> (i32, i32) {
    %c0_i32 = arith.constant 0 : i32
    %c0_i32_0 = arith.constant 0 : i32
    %c0_i32_1 = arith.constant 0 : i32
    return %c0_i32, %c0_i32_0 : i32, i32
  }
  func.func @transform_6(%arg0: i32) -> (i32, i32) {
    %c0_i32 = arith.constant 0 : i32
    %c0_i32_0 = arith.constant 0 : i32
    %c0_i32_1 = arith.constant 0 : i32
    return %c0_i32, %c0_i32_0 : i32, i32
  }
  func.func @transform_7(%arg0: i32) -> (i32, i32) {
    %c0_i32 = arith.constant 0 : i32
    %c0_i32_0 = arith.constant 0 : i32
    %c0_i32_1 = arith.constant 0 : i32
    return %c0_i32, %c0_i32_0 : i32, i32
  }
  func.func @transform_8(%arg0: i32) -> (i32, i32) {
    %c0_i32 = arith.constant 0 : i32
    %c0_i32_0 = arith.constant 0 : i32
    %c0_i32_1 = arith.constant 0 : i32
    return %c0_i32, %c0_i32_0 : i32, i32
  }
  func.func @transform_9(%arg0: i32) -> (i32, i32) {
    %c0_i32 = arith.constant 0 : i32
    %c0_i32_0 = arith.constant 0 : i32
    %c0_i32_1 = arith.constant 0 : i32
    return %c0_i32, %c0_i32_0 : i32, i32
  }
  func.func @transform_10(%arg0: i32) -> (i32, i32) {
    %c0_i32 = arith.constant 0 : i32
    %c0_i32_0 = arith.constant 0 : i32
    %c0_i32_1 = arith.constant 0 : i32
    return %c0_i32, %c0_i32_0 : i32, i32
  }
  func.func @transform_11(%arg0: i32) -> (i32, i32) {
    %c0_i32 = arith.constant 0 : i32
    %c0_i32_0 = arith.constant 0 : i32
    %c0_i32_1 = arith.constant 0 : i32
    return %c0_i32, %c0_i32_0 : i32, i32
  }
  func.func @transform_12(%arg0: i32) -> (i32, i32) {
    %c0_i32 = arith.constant 0 : i32
    %c0_i32_0 = arith.constant 0 : i32
    %c0_i32_1 = arith.constant 0 : i32
    return %c0_i32, %c0_i32_0 : i32, i32
  }
  func.func @transform_13(%arg0: i32) -> (i32, i32) {
    %c0_i32 = arith.constant 0 : i32
    %c0_i32_0 = arith.constant 0 : i32
    %c0_i32_1 = arith.constant 0 : i32
    return %c0_i32, %c0_i32_0 : i32, i32
  }
  func.func @transform_14(%arg0: i32) -> (i32, i32) {
    %c0_i32 = arith.constant 0 : i32
    %c0_i32_0 = arith.constant 0 : i32
    %c0_i32_1 = arith.constant 0 : i32
    return %c0_i32, %c0_i32_0 : i32, i32
  }
  func.func @transform_15(%arg0: i32) -> (i32, i32) {
    %c0_i32 = arith.constant 0 : i32
    %c0_i32_0 = arith.constant 0 : i32
    %c0_i32_1 = arith.constant 0 : i32
    return %c0_i32, %c0_i32_0 : i32, i32
  }
  func.func @transform_16(%arg0: i32) -> (i32, i32) {
    %c0_i32 = arith.constant 0 : i32
    %c0_i32_0 = arith.constant 0 : i32
    %c0_i32_1 = arith.constant 0 : i32
    return %c0_i32, %c0_i32_0 : i32, i32
  }
  func.func @transform_17(%arg0: i32) -> (i32, i32) {
    %c0_i32 = arith.constant 0 : i32
    %c0_i32_0 = arith.constant 0 : i32
    %c0_i32_1 = arith.constant 0 : i32
    return %c0_i32, %c0_i32_0 : i32, i32
  }
  func.func @transform_18(%arg0: i32) -> (i32, i32, i32) {
    %c0_i32 = arith.constant 0 : i32
    %c0_i32_0 = arith.constant 0 : i32
    %c0_i32_1 = arith.constant 0 : i32
    return %arg0, %c0_i32, %c0_i32_0 : i32, i32, i32
  }
}

</mosaic_0001>

<llo_original>
// kernel: tpu_custom_call.1
$region0: #{tpu_custom_call.1}
  #allocation0 [shape = 'u32[]', space=smem, size = 0x4, offset = 0x4, fixed_abs, tag = 'smem constant byte address 0x4 - core index']
  #allocation1 [shape = 'u32[144,128]{1,0:T(1,128)}', space=vmem, size = 0x12000, scoped, tag = 'internal scratch']
  %s0 = inlined_call_operand.hbm [shape: f32[2,8,32], index: 0, kind: input, shape index: {}]
  %s1 = inlined_call_operand.vmem [shape: s32[2,8,1], index: 1, kind: input, shape index: {}]
  %s2 = inlined_call_operand.hbm [shape: s32[2,8,8], index: 2, kind: input, shape index: {}]
  %s3 = inlined_call_operand.vmem [shape: s32[2,1,1], index: 3, kind: input, shape index: {}]
  %s4 = inlined_call_operand.hbm [shape: f32[32,96], index: 4, kind: input, shape index: {}]
  %s5 = inlined_call_operand.vmem [shape: f32[1,96], index: 5, kind: input, shape index: {}]
  %s6 = inlined_call_operand.hbm [shape: f32[9,32], index: 6, kind: input, shape index: {}]
  %s7 = inlined_call_operand.hbm [shape: f32[9,32], index: 7, kind: input, shape index: {}]
  %s8 = inlined_call_operand.hbm [shape: f32[17,32], index: 8, kind: input, shape index: {}]
  %s9 = inlined_call_operand.hbm [shape: f32[17,32], index: 9, kind: input, shape index: {}]
  %s10 = inlined_call_operand.vmem [shape: f32[1,32], index: 10, kind: input, shape index: {}]
  %s11 = inlined_call_operand.vmem [shape: f32[1,32], index: 11, kind: input, shape index: {}]
  %s12 = inlined_call_operand.vmem [shape: f32[32,32], index: 12, kind: input, shape index: {}]
  %s13 = inlined_call_operand.vmem [shape: f32[1,32], index: 13, kind: input, shape index: {}]
  %s14 = inlined_call_operand.hbm [shape: f32[32,32], index: 14, kind: input, shape index: {}]
  %s15 = inlined_call_operand.vmem [shape: f32[1,32], index: 15, kind: input, shape index: {}]
  %s16 = inlined_call_operand.vmem [shape: f32[1,32], index: 16, kind: input, shape index: {}]
  %s17 = inlined_call_operand.vmem [shape: f32[1,32], index: 17, kind: input, shape index: {}]
  %s18 = inlined_call_operand.hbm [shape: f32[2,1,32], index: 18, kind: output, shape index: {}]
  %s19 = sld [smem:[#allocation0]]
  $region114: #{tpu_custom_call.1} parent=0
    _
  %s21 = ssub.s32 1, %s19
  %s22 = scalar_select 0, %s21, %s19
  $region1: #{tpu_custom_call.1} parent=0
    #allocation2 [shape = 'u8[8192]{0}', space=vmem, size = 0x2000, scoped, tag = 'input window, operand 0, single buffered']
    #allocation3 [shape = 's32[1]{0}', space=sflag, size = 0x4, scoped, tag = 'scoped memory for tpu_custom_call.1']
    #allocation4 [shape = 's32[1]{0}', space=sflag, size = 0x4, scoped, tag = 'scoped memory for tpu_custom_call.1']
    #allocation5 [shape = 'u8[8192]{0}', space=vmem, size = 0x2000, scoped, tag = 'input window, operand 2, single buffered']
    #allocation6 [shape = 's32[1]{0}', space=sflag, size = 0x4, scoped, tag = 'scoped memory for tpu_custom_call.1']
    #allocation7 [shape = 'u8[16384]{0}', space=vmem, size = 0x4000, scoped, tag = 'input window, operand 4, single buffered']
    #allocation8 [shape = 'u8[8192]{0}', space=vmem, size = 0x2000, scoped, tag = 'input window, operand 6, single buffered']
    #allocation9 [shape = 's32[1]{0}', space=sflag, size = 0x4, scoped, tag = 'scoped memory for tpu_custom_call.1']
    #allocation10 [shape = 'u8[8192]{0}', space=vmem, size = 0x2000, scoped, tag = 'input window, operand 7, single buffered']
    #allocation11 [shape = 'u8[12288]{0}', space=vmem, size = 0x3000, scoped, tag = 'input window, operand 8, single buffered']
    #allocation12 [shape = 's32[1]{0}', space=sflag, size = 0x4, scoped, tag = 'scoped memory for tpu_custom_call.1']
    #allocation13 [shape = 'u8[12288]{0}', space=vmem, size = 0x3000, scoped, tag = 'input window, operand 9, single buffered']
    #allocation14 [shape = 'u8[16384]{0}', space=vmem, size = 0x4000, scoped, tag = 'input window, operand 14, single buffered']
    #allocation15 [shape = 's32[1]{0}', space=sflag, size = 0x4, scoped, tag = 'scoped memory for tpu_custom_call.1']
    #allocation16 [shape = 'u8[1024]{0}', space=vmem, size = 0x400, scoped, tag = 'output window, operand 0, single buffered']
    %23 = vsyncpa [#allocation3], 0
    %24 = vsyncpa [#allocation6], 0
    %25 = vsyncpa [#allocation9], 0
    %26 = vsyncpa [#allocation12], 0
    %27 = vsyncpa [#allocation15], 0
    %28 = vsyncpa [#allocation4], 0
    // Predicated region
    $region2: #{tpu_custom_call.1} parent=1 // pred_check
      _
    $region3: #{tpu_custom_call.1} parent=1 // pred_check_branch
      %30 = sbr.rel (0) target = $region5
    $region4: #{tpu_custom_call.1} parent=1 // pred_region
      %s32 = ssub.s32 256, 256
      %33 = vsyncadd [#allocation3], %s32
      %s34 = sshll.u32 [#allocation2], 4
      %s35 = int_to_ptr.vmem [resolvable:$true] %s34
      %40 = dma.hbm_to_vmem [thread:$0]  %s0, 256, %s35, [#allocation3], 128, 128, 8
    $region5: #{tpu_custom_call.1} parent=1 // pred_fallthru
      _
    // Predicated region
    $region6: #{tpu_custom_call.1} parent=1 // pred_check
      _
    $region7: #{tpu_custom_call.1} parent=1 // pred_check_branch
      %42 = sbr.rel (0) target = $region9
    $region8: #{tpu_custom_call.1} parent=1 // pred_region
      _
    $region9: #{tpu_custom_call.1} parent=1 // pred_fallthru
      _
    // Predicated region
    $region10: #{tpu_custom_call.1} parent=1 // pred_check
      _
    $region11: #{tpu_custom_call.1} parent=1 // pred_check_branch
      %44 = sbr.rel (0) target = $region13
    $region12: #{tpu_custom_call.1} parent=1 // pred_region
      %s46 = ssub.s32 256, 256
      %47 = vsyncadd [#allocation6], %s46
      %s48 = sshll.u32 [#allocation5], 4
      %s49 = int_to_ptr.vmem [resolvable:$true] %s48
      %54 = dma.hbm_to_vmem [thread:$0]  %s2, 256, %s49, [#allocation6], 128, 128, 8
    $region13: #{tpu_custom_call.1} parent=1 // pred_fallthru
      _
    // Predicated region
    $region14: #{tpu_custom_call.1} parent=1 // pred_check
      _
    $region15: #{tpu_custom_call.1} parent=1 // pred_check_branch
      %56 = sbr.rel (0) target = $region17
    $region16: #{tpu_custom_call.1} parent=1 // pred_region
      _
    $region17: #{tpu_custom_call.1} parent=1 // pred_fallthru
      _
    // Predicated region
    $region18: #{tpu_custom_call.1} parent=1 // pred_check
      _
    $region19: #{tpu_custom_call.1} parent=1 // pred_check_branch
      %58 = sbr.rel (0) target = $region21
    $region20: #{tpu_custom_call.1} parent=1 // pred_region
      %s60 = ssub.s32 512, 512
      %61 = vsyncadd [#allocation6], %s60
      %s62 = sshll.u32 [#allocation7], 4
      %s63 = int_to_ptr.vmem [resolvable:$true] %s62
      %68 = dma.hbm_to_vmem [thread:$0]  %s4, 512, %s63, [#allocation6], 128, 128, 8
    $region21: #{tpu_custom_call.1} parent=1 // pred_fallthru
      _
    // Predicated region
    $region22: #{tpu_custom_call.1} parent=1 // pred_check
      _
    $region23: #{tpu_custom_call.1} parent=1 // pred_check_branch
      %70 = sbr.rel (0) target = $region25
    $region24: #{tpu_custom_call.1} parent=1 // pred_region
      _
    $region25: #{tpu_custom_call.1} parent=1 // pred_fallthru
      _
    // Predicated region
    $region26: #{tpu_custom_call.1} parent=1 // pred_check
      _
    $region27: #{tpu_custom_call.1} parent=1 // pred_check_branch
      %72 = sbr.rel (0) target = $region29
    $region28: #{tpu_custom_call.1} parent=1 // pred_region
      %s74 = ssub.s32 256, 256
      %75 = vsyncadd [#allocation9], %s74
      %s76 = sshll.u32 [#allocation8], 4
      %s77 = int_to_ptr.vmem [resolvable:$true] %s76
      %82 = dma.hbm_to_vmem [thread:$0]  %s6, 256, %s77, [#allocation9], 128, 128, 8
    $region29: #{tpu_custom_call.1} parent=1 // pred_fallthru
      _
    // Predicated region
    $region30: #{tpu_custom_call.1} parent=1 // pred_check
      _
    $region31: #{tpu_custom_call.1} parent=1 // pred_check_branch
      %84 = sbr.rel (0) target = $region33
    $region32: #{tpu_custom_call.1} parent=1 // pred_region
      %s86 = ssub.s32 256, 256
      %87 = vsyncadd [#allocation9], %s86
      %s88 = sshll.u32 [#allocation10], 4
      %s89 = int_to_ptr.vmem [resolvable:$true] %s88
      %94 = dma.hbm_to_vmem [thread:$0]  %s7, 256, %s89, [#allocation9], 128, 128, 8
    $region33: #{tpu_custom_call.1} parent=1 // pred_fallthru
      _
    // Predicated region
    $region34: #{tpu_custom_call.1} parent=1 // pred_check
      _
    $region35: #{tpu_custom_call.1} parent=1 // pred_check_branch
      %96 = sbr.rel (0) target = $region37
    $region36: #{tpu_custom_call.1} parent=1 // pred_region
      %s98 = ssub.s32 384, 384
      %99 = vsyncadd [#allocation12], %s98
      %s100 = sshll.u32 [#allocation11], 4
      %s101 = int_to_ptr.vmem [resolvable:$true] %s100
      %106 = dma.hbm_to_vmem [thread:$0]  %s8, 384, %s101, [#allocation12], 128, 128, 8
    $region37: #{tpu_custom_call.1} parent=1 // pred_fallthru
      _
    // Predicated region
    $region38: #{tpu_custom_call.1} parent=1 // pred_check
      _
    $region39: #{tpu_custom_call.1} parent=1 // pred_check_branch
      %108 = sbr.rel (0) target = $region41
    $region40: #{tpu_custom_call.1} parent=1 // pred_region
      %s110 = ssub.s32 384, 384
      %111 = vsyncadd [#allocation12], %s110
      %s112 = sshll.u32 [#allocation13], 4
      %s113 = int_to_ptr.vmem [resolvable:$true] %s112
      %118 = dma.hbm_to_vmem [thread:$0]  %s9, 384, %s113, [#allocation12], 128, 128, 8
    $region41: #{tpu_custom_call.1} parent=1 // pred_fallthru
      _
    // Predicated region
    $region42: #{tpu_custom_call.1} parent=1 // pred_check
      _
    $region43: #{tpu_custom_call.1} parent=1 // pred_check_branch
      %120 = sbr.rel (0) target = $region45
    $region44: #{tpu_custom_call.1} parent=1 // pred_region
      _
    $region45: #{tpu_custom_call.1} parent=1 // pred_fallthru
      _
    // Predicated region
    $region46: #{tpu_custom_call.1} parent=1 // pred_check
      _
    $region47: #{tpu_custom_call.1} parent=1 // pred_check_branch
      %122 = sbr.rel (0) target = $region49
    $region48: #{tpu_custom_call.1} parent=1 // pred_region
      _
    $region49: #{tpu_custom_call.1} parent=1 // pred_fallthru
      _
    // Predicated region
    $region50: #{tpu_custom_call.1} parent=1 // pred_check
      _
    $region51: #{tpu_custom_call.1} parent=1 // pred_check_branch
      %124 = sbr.rel (0) target = $region53
    $region52: #{tpu_custom_call.1} parent=1 // pred_region
      _
    $region53: #{tpu_custom_call.1} parent=1 // pred_fallthru
      _
    // Predicated region
    $region54: #{tpu_custom_call.1} parent=1 // pred_check
      _
    $region55: #{tpu_custom_call.1} parent=1 // pred_check_branch
      %126 = sbr.rel (0) target = $region57
    $region56: #{tpu_custom_call.1} parent=1 // pred_region
      _
    $region57: #{tpu_custom_call.1} parent=1 // pred_fallthru
      _
    // Predicated region
    $region58: #{tpu_custom_call.1} parent=1 // pred_check
      _
    $region59: #{tpu_custom_call.1} parent=1 // pred_check_branch
      %128 = sbr.rel (0) target = $region61
    $region60: #{tpu_custom_call.1} parent=1 // pred_region
      %s130 = ssub.s32 512, 512
      %131 = vsyncadd [#allocation15], %s130
      %s132 = sshll.u32 [#allocation14], 4
      %s133 = int_to_ptr.vmem [resolvable:$true] %s132
      %138 = dma.hbm_to_vmem [thread:$0]  %s14, 512, %s133, [#allocation15], 128, 128, 8
    $region61: #{tpu_custom_call.1} parent=1 // pred_fallthru
      _
    // Predicated region
    $region62: #{tpu_custom_call.1} parent=1 // pred_check
      _
    $region63: #{tpu_custom_call.1} parent=1 // pred_check_branch
      %140 = sbr.rel (0) target = $region65
    $region64: #{tpu_custom_call.1} parent=1 // pred_region
      _
    $region65: #{tpu_custom_call.1} parent=1 // pred_fallthru
      _
    // Predicated region
    $region66: #{tpu_custom_call.1} parent=1 // pred_check
      _
    $region67: #{tpu_custom_call.1} parent=1 // pred_check_branch
      %142 = sbr.rel (0) target = $region69
    $region68: #{tpu_custom_call.1} parent=1 // pred_region
      _
    $region69: #{tpu_custom_call.1} parent=1 // pred_fallthru
      _
    // Predicated region
    $region70: #{tpu_custom_call.1} parent=1 // pred_check
      _
    $region71: #{tpu_custom_call.1} parent=1 // pred_check_branch
      %144 = sbr.rel (0) target = $region73
    $region72: #{tpu_custom_call.1} parent=1 // pred_region
      _
    $region73: #{tpu_custom_call.1} parent=1 // pred_fallthru
      _
    // Predicated region
    $region74: #{tpu_custom_call.1} parent=1 // pred_check
      _
    $region75: #{tpu_custom_call.1} parent=1 // pred_check_branch
      %146 = sbr.rel (0) target = $region77
    $region76: #{tpu_custom_call.1} parent=1 // pred_region
      %147 = dma.done [#allocation3], 256
    $region77: #{tpu_custom_call.1} parent=1 // pred_fallthru
      _
    // Predicated region
    $region78: #{tpu_custom_call.1} parent=1 // pred_check
      _
    $region79: #{tpu_custom_call.1} parent=1 // pred_check_branch
      %149 = sbr.rel (0) target = $region81
    $region80: #{tpu_custom_call.1} parent=1 // pred_region
      %150 = dma.done [#allocation6], 256
    $region81: #{tpu_custom_call.1} parent=1 // pred_fallthru
      _
    // Predicated region
    $region82: #{tpu_custom_call.1} parent=1 // pred_check
      _
    $region83: #{tpu_custom_call.1} parent=1 // pred_check_branch
      %152 = sbr.rel (0) target = $region85
    $region84: #{tpu_custom_call.1} parent=1 // pred_region
      %153 = dma.done [#allocation6], 512
    $region85: #{tpu_custom_call.1} parent=1 // pred_fallthru
      _
    // Predicated region
    $region86: #{tpu_custom_call.1} parent=1 // pred_check
      _
    $region87: #{tpu_custom_call.1} parent=1 // pred_check_branch
      %155 = sbr.rel (0) target = $region89
    $region88: #{tpu_custom_call.1} parent=1 // pred_region
      %156 = dma.done [#allocation9], 256
    $region89: #{tpu_custom_call.1} parent=1 // pred_fallthru
      _
    // Predicated region
    $region90: #{tpu_custom_call.1} parent=1 // pred_check
      _
    $region91: #{tpu_custom_call.1} parent=1 // pred_check_branch
      %158 = sbr.rel (0) target = $region93
    $region92: #{tpu_custom_call.1} parent=1 // pred_region
      %159 = dma.done [#allocation9], 256
    $region93: #{tpu_custom_call.1} parent=1 // pred_fallthru
      _
    // Predicated region
    $region94: #{tpu_custom_call.1} parent=1 // pred_check
      _
    $region95: #{tpu_custom_call.1} parent=1 // pred_check_branch
      %161 = sbr.rel (0) target = $region97
    $region96: #{tpu_custom_call.1} parent=1 // pred_region
      %162 = dma.done [#allocation12], 384
    $region97: #{tpu_custom_call.1} parent=1 // pred_fallthru
      _
    // Predicated region
    $region98: #{tpu_custom_call.1} parent=1 // pred_check
      _
    $region99: #{tpu_custom_call.1} parent=1 // pred_check_branch
      %164 = sbr.rel (0) target = $region101
    $region100: #{tpu_custom_call.1} parent=1 // pred_region
      %165 = dma.done [#allocation12], 384
    $region101: #{tpu_custom_call.1} parent=1 // pred_fallthru
      _
    // Predicated region
    $region102: #{tpu_custom_call.1} parent=1 // pred_check
      _
    $region103: #{tpu_custom_call.1} parent=1 // pred_check_branch
      %167 = sbr.rel (0) target = $region105
    $region104: #{tpu_custom_call.1} parent=1 // pred_region
      %168 = dma.done [#allocation15], 512
    $region105: #{tpu_custom_call.1} parent=1 // pred_fallthru
      _
    %v169 = vld [vmem:[#allocation2] sm:$0xff]
    %v170 = vld [vmem:[#allocation2 + $0x8] sm:$0xff]
    %v171 = vld [vmem:[#allocation7] sm:$0xff]
    %v172 = vld [vmem:[#allocation7 + $0x8] sm:$0xff]
    %v173 = vld [vmem:[#allocation7 + $0x10] sm:$0xff]
    %v174 = vld [vmem:[#allocation7 + $0x18] sm:$0xff]
    %v175 = vld [vmem:[%s5] sm:$0x1]
    %v177 = vlaneseq
    %v178 = vshrl.u32 %v177, 7
    %v179 = vsub.s32 0, %v178
    %v180 = vrot.slane %v175, %v179
    %vm182 = vcmask 261120
    %v184 = vsel %vm182, %v169, 0
    %v187 = vsel %vm182, %v170, 0
    %189 = vmatprep.subr.mxu0 0.0
    %190 = vmatpush1.msra.mxu0 0.0
    %191 = vmatprep.subr.mxu0 0.0
    %192 = vmatpush1.msra.mxu0 0.0
    %193 = vmatprep.subr.mxu0 0.0
    %194 = vmatpush1.msra.mxu0 0.0
    %195 = vmatprep.subr.mxu0 0.0
    %196 = vmatpush1.msra.mxu0 0.0
    %197 = vmatprep.subr.mxu0 0.0
    %198 = vmatpush1.msra.mxu0 0.0
    %199 = vmatprep.subr.mxu0 0.0
    %200 = vmatpush1.msra.mxu0 0.0
    %201 = vmatprep.subr.mxu0 0.0
    %202 = vmatpush1.msra.mxu0 0.0
    %203 = vmatprep.subr.mxu0 0.0
    %204 = vmatpush1.msra.mxu0 0.0
    %205 = vmatprep.subr.mxu0 0.0
    %206 = vmatpush1.msra.mxu0 0.0
    %207 = vmatprep.subr.mxu0 0.0
    %208 = vmatpush1.msra.mxu0 0.0
    %209 = vmatprep.subr.mxu0 0.0
    %210 = vmatpush1.msra.mxu0 0.0
    %211 = vmatprep.subr.mxu0 0.0
    %212 = vmatpush1.msra.mxu0 0.0
    %213 = vmatprep.subr.mxu0 0.0
    %214 = vmatpush1.msra.mxu0 %v174
    %215 = vmatprep.subr.mxu0 0.0
    %216 = vmatpush1.msra.mxu0 %v173
    %217 = vmatprep.subr.mxu0 0.0
    %218 = vmatpush1.msra.mxu0 %v172
    %219 = vmatprep.subr.mxu0 0.0
    %220 = vmatpush1.msra.mxu0 %v171
    %221 = vmatprep.subr.mxu0 0.0
    %222 = vmatpush2.msra.mxu0 0.0
    %223 = vmatprep.subr.mxu0 0.0
    %224 = vmatpush2.msra.mxu0 0.0
    %225 = vmatprep.subr.mxu0 0.0
    %226 = vmatpush2.msra.mxu0 0.0
    %227 = vmatprep.subr.mxu0 0.0
    %228 = vmatpush2.msra.mxu0 0.0
    %229 = vmatprep.subr.mxu0 0.0
    %230 = vmatpush2.msra.mxu0 0.0
    %231 = vmatprep.subr.mxu0 0.0
    %232 = vmatpush2.msra.mxu0 0.0
    %233 = vmatprep.subr.mxu0 0.0
    %234 = vmatpush2.msra.mxu0 0.0
    %235 = vmatprep.subr.mxu0 0.0
    %236 = vmatpush2.msra.mxu0 0.0
    %237 = vmatprep.subr.mxu0 0.0
    %238 = vmatpush2.msra.mxu0 0.0
    %239 = vmatprep.subr.mxu0 0.0
    %240 = vmatpush2.msra.mxu0 0.0
    %241 = vmatprep.subr.mxu0 0.0
    %242 = vmatpush2.msra.mxu0 0.0
    %243 = vmatprep.subr.mxu0 0.0
    %244 = vmatpush2.msra.mxu0 0.0
    %245 = vmatprep.subr.mxu0 0.0
    %246 = vmatpush2.msra.mxu0 0.0
    %247 = vmatprep.subr.mxu0 0.0
    %248 = vmatpush2.msra.mxu0 0.0
    %249 = vmatprep.subr.mxu0 0.0
    %250 = vmatpush2.msra.mxu0 0.0
    %251 = vmatprep.subr.mxu0 0.0
    %252 = vmatpush2.msra.mxu0 0.0
    %253 = vmatprep.mubr.f32.mxu0 0.0
    %254 = vmatmul.mubr.f32.gmra.mxu0 %v184
    %v255 = vpop.f32.mrf.mxu0
    %v256 = vadd.f32 %v180, %v255
    %v257 = vpop.f32.mrf.mxu0
    %258 = vmatprep.mubr.f32.mxu0 0.0
    %259 = vmatmul.mubr.f32.gmra.mxu0 %v187
    %v260 = vpop.f32.mrf.mxu0
    %v261 = vadd.f32 %v180, %v260
    %v262 = vpop.f32.mrf.mxu0
    %263 = vdwg.mxu0
    %v264 = vld [vmem:[%s1] sm:$0xff]
    %v265 = vld [vmem:[%s1 + $0x8] sm:$0xff]
    %v266 = vlaneseq
    %v267 = vand.u32 %v266, 127
    %268 = vset.pattern.permute.xlu0 0
    %269 = vperm.xlu0 %268, %v264
    %v270 = vpop.permute.xlu0 %269
    %271 = vset.pattern.permute.xlu0 0
    %272 = vperm.xlu0 %271, %v265
    %v273 = vpop.permute.xlu0 %272
    %vm274 = vcmp.eq.s32.totalorder %v270, %v267
    %vm275 = vcmp.eq.s32.totalorder %v273, %v267
    %v276 = vsel %vm274, 1, 0
    %v277 = vsel %vm275, 1, 0
    %v278 = vcvt.s32.f32 %v276
    %v279 = vcvt.s32.f32 %v277
    %v280 = vld [vmem:[#allocation8] sm:$0xff]
    %v281 = vld [vmem:[#allocation8 + $0x8] sm:$0x1]
    %vm282 = vcmask 72704
    %v284 = vsel %vm282, %v278, 0
    %v287 = vsel %vm282, %v279, 0
    %vm289 = vcmask 1040384
    %v291 = vsel %vm289, %v281, 0
    %293 = vmatprep.subr.mxu0 0.0
    %294 = vmatpush1.msra.mxu0 0.0
    %295 = vmatprep.subr.mxu0 0.0
    %296 = vmatpush1.msra.mxu0 0.0
    %297 = vmatprep.subr.mxu0 0.0
    %298 = vmatpush1.msra.mxu0 0.0
    %299 = vmatprep.subr.mxu0 0.0
    %300 = vmatpush1.msra.mxu0 0.0
    %301 = vmatprep.subr.mxu0 0.0
    %302 = vmatpush1.msra.mxu0 0.0
    %303 = vmatprep.subr.mxu0 0.0
    %304 = vmatpush1.msra.mxu0 0.0
    %305 = vmatprep.subr.mxu0 0.0
    %306 = vmatpush1.msra.mxu0 0.0
    %307 = vmatprep.subr.mxu0 0.0
    %308 = vmatpush1.msra.mxu0 0.0
    %309 = vmatprep.subr.mxu0 0.0
    %310 = vmatpush1.msra.mxu0 0.0
    %311 = vmatprep.subr.mxu0 0.0
    %312 = vmatpush1.msra.mxu0 0.0
    %313 = vmatprep.subr.mxu0 0.0
    %314 = vmatpush1.msra.mxu0 0.0
    %315 = vmatprep.subr.mxu0 0.0
    %316 = vmatpush1.msra.mxu0 0.0
    %317 = vmatprep.subr.mxu0 0.0
    %318 = vmatpush1.msra.mxu0 0.0
    %319 = vmatprep.subr.mxu0 0.0
    %320 = vmatpush1.msra.mxu0 0.0
    %321 = vmatprep.subr.mxu0 0.0
    %322 = vmatpush1.msra.mxu0 %v291
    %323 = vmatprep.subr.mxu0 0.0
    %324 = vmatpush1.msra.mxu0 %v280
    %325 = vmatprep.subr.mxu0 0.0
    %326 = vmatpush2.msra.mxu0 0.0
    %327 = vmatprep.subr.mxu0 0.0
    %328 = vmatpush2.msra.mxu0 0.0
    %329 = vmatprep.subr.mxu0 0.0
    %330 = vmatpush2.msra.mxu0 0.0
    %331 = vmatprep.subr.mxu0 0.0
    %332 = vmatpush2.msra.mxu0 0.0
    %333 = vmatprep.subr.mxu0 0.0
    %334 = vmatpush2.msra.mxu0 0.0
    %335 = vmatprep.subr.mxu0 0.0
    %336 = vmatpush2.msra.mxu0 0.0
    %337 = vmatprep.subr.mxu0 0.0
    %338 = vmatpush2.msra.mxu0 0.0
    %339 = vmatprep.subr.mxu0 0.0
    %340 = vmatpush2.msra.mxu0 0.0
    %341 = vmatprep.subr.mxu0 0.0
    %342 = vmatpush2.msra.mxu0 0.0
    %343 = vmatprep.subr.mxu0 0.0
    %344 = vmatpush2.msra.mxu0 0.0
    %345 = vmatprep.subr.mxu0 0.0
    %346 = vmatpush2.msra.mxu0 0.0
    %347 = vmatprep.subr.mxu0 0.0
    %348 = vmatpush2.msra.mxu0 0.0
    %349 = vmatprep.subr.mxu0 0.0
    %350 = vmatpush2.msra.mxu0 0.0
    %351 = vmatprep.subr.mxu0 0.0
    %352 = vmatpush2.msra.mxu0 0.0
    %353 = vmatprep.subr.mxu0 0.0
    %354 = vmatpush2.msra.mxu0 0.0
    %355 = vmatprep.subr.mxu0 0.0
    %356 = vmatpush2.msra.mxu0 0.0
    %357 = vmatprep.mubr.f32.mxu0 0.0
    %358 = vmatmul.mubr.f32.gmra.mxu0 %v284
    %v359 = vpop.f32.mrf.mxu0
    %v360 = vadd.f32 0.0, %v359
    %v361 = vpop.f32.mrf.mxu0
    %362 = vmatprep.mubr.f32.mxu0 0.0
    %363 = vmatmul.mubr.f32.gmra.mxu0 %v287
    %v364 = vpop.f32.mrf.mxu0
    %v365 = vadd.f32 0.0, %v364
    %v366 = vpop.f32.mrf.mxu0
    %367 = vdwg.mxu0
    %v368 = vld [vmem:[#allocation10] sm:$0xff]
    %v369 = vld [vmem:[#allocation10 + $0x8] sm:$0x1]
    %v371 = vsel %vm289, %v369, 0
    %373 = vmatprep.subr.mxu0 0.0
    %374 = vmatpush1.msra.mxu0 0.0
    %375 = vmatprep.subr.mxu0 0.0
    %376 = vmatpush1.msra.mxu0 0.0
    %377 = vmatprep.subr.mxu0 0.0
    %378 = vmatpush1.msra.mxu0 0.0
    %379 = vmatprep.subr.mxu0 0.0
    %380 = vmatpush1.msra.mxu0 0.0
    %381 = vmatprep.subr.mxu0 0.0
    %382 = vmatpush1.msra.mxu0 0.0
    %383 = vmatprep.subr.mxu0 0.0
    %384 = vmatpush1.msra.mxu0 0.0
    %385 = vmatprep.subr.mxu0 0.0
    %386 = vmatpush1.msra.mxu0 0.0
    %387 = vmatprep.subr.mxu0 0.0
    %388 = vmatpush1.msra.mxu0 0.0
    %389 = vmatprep.subr.mxu0 0.0
    %390 = vmatpush1.msra.mxu0 0.0
    %391 = vmatprep.subr.mxu0 0.0
    %392 = vmatpush1.msra.mxu0 0.0
    %393 = vmatprep.subr.mxu0 0.0
    %394 = vmatpush1.msra.mxu0 0.0
    %395 = vmatprep.subr.mxu0 0.0
    %396 = vmatpush1.msra.mxu0 0.0
    %397 = vmatprep.subr.mxu0 0.0
    %398 = vmatpush1.msra.mxu0 0.0
    %399 = vmatprep.subr.mxu0 0.0
    %400 = vmatpush1.msra.mxu0 0.0
    %401 = vmatprep.subr.mxu0 0.0
    %402 = vmatpush1.msra.mxu0 %v371
    %403 = vmatprep.subr.mxu0 0.0
    %404 = vmatpush1.msra.mxu0 %v368
    %405 = vmatprep.subr.mxu0 0.0
    %406 = vmatpush2.msra.mxu0 0.0
    %407 = vmatprep.subr.mxu0 0.0
    %408 = vmatpush2.msra.mxu0 0.0
    %409 = vmatprep.subr.mxu0 0.0
    %410 = vmatpush2.msra.mxu0 0.0
    %411 = vmatprep.subr.mxu0 0.0
    %412 = vmatpush2.msra.mxu0 0.0
    %413 = vmatprep.subr.mxu0 0.0
    %414 = vmatpush2.msra.mxu0 0.0
    %415 = vmatprep.subr.mxu0 0.0
    %416 = vmatpush2.msra.mxu0 0.0
    %417 = vmatprep.subr.mxu0 0.0
    %418 = vmatpush2.msra.mxu0 0.0
    %419 = vmatprep.subr.mxu0 0.0
    %420 = vmatpush2.msra.mxu0 0.0
    %421 = vmatprep.subr.mxu0 0.0
    %422 = vmatpush2.msra.mxu0 0.0
    %423 = vmatprep.subr.mxu0 0.0
    %424 = vmatpush2.msra.mxu0 0.0
    %425 = vmatprep.subr.mxu0 0.0
    %426 = vmatpush2.msra.mxu0 0.0
    %427 = vmatprep.subr.mxu0 0.0
    %428 = vmatpush2.msra.mxu0 0.0
    %429 = vmatprep.subr.mxu0 0.0
    %430 = vmatpush2.msra.mxu0 0.0
    %431 = vmatprep.subr.mxu0 0.0
    %432 = vmatpush2.msra.mxu0 0.0
    %433 = vmatprep.subr.mxu0 0.0
    %434 = vmatpush2.msra.mxu0 0.0
    %435 = vmatprep.subr.mxu0 0.0
    %436 = vmatpush2.msra.mxu0 0.0
    %437 = vmatprep.mubr.f32.mxu0 0.0
    %438 = vmatmul.mubr.f32.gmra.mxu0 %v284
    %v439 = vpop.f32.mrf.mxu0
    %v440 = vadd.f32 0.0, %v439
    %v441 = vpop.f32.mrf.mxu0
    %442 = vmatprep.mubr.f32.mxu0 0.0
    %443 = vmatmul.mubr.f32.gmra.mxu0 %v287
    %v444 = vpop.f32.mrf.mxu0
    %v445 = vadd.f32 0.0, %v444
    %v446 = vpop.f32.mrf.mxu0
    %447 = vdwg.mxu0
    %450 = vrot.lane.b32.xlu0 %v360, 32
    %v451 = vpop.permute.xlu0 %450
    %452 = vrot.lane.b32.xlu0 %v365, 32
    %v453 = vpop.permute.xlu0 %452
    %v456 = vadd.f32 %v256, %v451
    %v457 = vadd.f32 %v261, %v453
    %460 = vrot.lane.b32.xlu0 %v440, 64
    %v461 = vpop.permute.xlu0 %460
    %462 = vrot.lane.b32.xlu0 %v445, 64
    %v463 = vpop.permute.xlu0 %462
    %v466 = vadd.f32 %v256, %v461
    %v467 = vadd.f32 %v261, %v463
    %v468 = vld [vmem:[#allocation11] sm:$0xff]
    %v469 = vld [vmem:[#allocation11 + $0x8] sm:$0xff]
    %v470 = vld [vmem:[#allocation11 + $0x10] sm:$0x1]
    %v472 = vsel %vm182, %v256, 0
    %v475 = vsel %vm182, %v261, 0
    %v478 = vsel %vm182, %v468, 0
    %v481 = vsel %vm182, %v469, 0
    %v484 = vsel %vm182, %v470, 0
    %486 = vmatprep.subr.mxu0 0.0
    %487 = vmatpush1.xpose.msra.mxu0 0.0
    %488 = vmatprep.subr.mxu0 0.0
    %489 = vmatpush1.xpose.msra.mxu0 0.0
    %490 = vmatprep.subr.mxu0 0.0
    %491 = vmatpush1.xpose.msra.mxu0 0.0
    %492 = vmatprep.subr.mxu0 0.0
    %493 = vmatpush1.xpose.msra.mxu0 0.0
    %494 = vmatprep.subr.mxu0 0.0
    %495 = vmatpush1.xpose.msra.mxu0 0.0
    %496 = vmatprep.subr.mxu0 0.0
    %497 = vmatpush1.xpose.msra.mxu0 0.0
    %498 = vmatprep.subr.mxu0 0.0
    %499 = vmatpush1.xpose.msra.mxu0 0.0
    %500 = vmatprep.subr.mxu0 0.0
    %501 = vmatpush1.xpose.msra.mxu0 0.0
    %502 = vmatprep.subr.mxu0 0.0
    %503 = vmatpush1.xpose.msra.mxu0 0.0
    %504 = vmatprep.subr.mxu0 0.0
    %505 = vmatpush1.xpose.msra.mxu0 0.0
    %506 = vmatprep.subr.mxu0 0.0
    %507 = vmatpush1.xpose.msra.mxu0 0.0
    %508 = vmatprep.subr.mxu0 0.0
    %509 = vmatpush1.xpose.msra.mxu0 0.0
    %510 = vmatprep.subr.mxu0 0.0
    %511 = vmatpush1.xpose.msra.mxu0 0.0
    %512 = vmatprep.subr.mxu0 0.0
    %513 = vmatpush1.xpose.msra.mxu0 %v484
    %514 = vmatprep.subr.mxu0 0.0
    %515 = vmatpush1.xpose.msra.mxu0 %v481
    %516 = vmatprep.subr.mxu0 0.0
    %517 = vmatpush1.xpose.msra.mxu0 %v478
    %518 = vmatprep.subr.mxu0 0.0
    %519 = vmatpush2.xpose.msra.mxu0 0.0
    %520 = vmatprep.subr.mxu0 0.0
    %521 = vmatpush2.xpose.msra.mxu0 0.0
    %522 = vmatprep.subr.mxu0 0.0
    %523 = vmatpush2.xpose.msra.mxu0 0.0
    %524 = vmatprep.subr.mxu0 0.0
    %525 = vmatpush2.xpose.msra.mxu0 0.0
    %526 = vmatprep.subr.mxu0 0.0
    %527 = vmatpush2.xpose.msra.mxu0 0.0
    %528 = vmatprep.subr.mxu0 0.0
    %529 = vmatpush2.xpose.msra.mxu0 0.0
    %530 = vmatprep.subr.mxu0 0.0
    %531 = vmatpush2.xpose.msra.mxu0 0.0
    %532 = vmatprep.subr.mxu0 0.0
    %533 = vmatpush2.xpose.msra.mxu0 0.0
    %534 = vmatprep.subr.mxu0 0.0
    %535 = vmatpush2.xpose.msra.mxu0 0.0
    %536 = vmatprep.subr.mxu0 0.0
    %537 = vmatpush2.xpose.msra.mxu0 0.0
    %538 = vmatprep.subr.mxu0 0.0
    %539 = vmatpush2.xpose.msra.mxu0 0.0
    %540 = vmatprep.subr.mxu0 0.0
    %541 = vmatpush2.xpose.msra.mxu0 0.0
    %542 = vmatprep.subr.mxu0 0.0
    %543 = vmatpush2.xpose.msra.mxu0 0.0
    %544 = vmatprep.subr.mxu0 0.0
    %545 = vmatpush2.xpose.msra.mxu0 0.0
    %546 = vmatprep.subr.mxu0 0.0
    %547 = vmatpush2.xpose.msra.mxu0 0.0
    %548 = vmatprep.subr.mxu0 0.0
    %549 = vmatpush2.xpose.msra.mxu0 0.0
    %550 = vmatprep.mubr.f32.mxu0 0.0
    %551 = vmatmul.mubr.f32.gmra.mxu0 %v472
    %v552 = vpop.f32.mrf.mxu0
    %v553 = vadd.f32 0.0, %v552
    %v554 = vpop.f32.mrf.mxu0
    %555 = vmatprep.mubr.f32.mxu0 0.0
    %556 = vmatmul.mubr.f32.gmra.mxu0 %v475
    %v557 = vpop.f32.mrf.mxu0
    %v558 = vadd.f32 0.0, %v557
    %v559 = vpop.f32.mrf.mxu0
    %560 = vdwg.mxu0
    %v561 = vld [vmem:[#allocation5] sm:$0xff]
    %v562 = vld [vmem:[#allocation5 + $0x8] sm:$0xff]
    %v563 = vlaneseq
    %v564 = vshrl.u32 %v563, 7
    %v565 = vsub.s32 0, %v564
    %v566 = vrot.slane %v561, %v565
    %568 = vbcast.lane.b32.xlu0 %v566, 256
    %v569 = vpop.permute.xlu0 %568
    %v570 = vlaneseq
    %v571 = vshrl.u32 %v570, 7
    %v572 = vsub.s32 1, %v571
    %v573 = vrot.slane %v561, %v572
    %575 = vbcast.lane.b32.xlu0 %v573, 256
    %v576 = vpop.permute.xlu0 %575
    %v577 = vlaneseq
    %v578 = vshrl.u32 %v577, 7
    %v579 = vsub.s32 2, %v578
    %v580 = vrot.slane %v561, %v579
    %582 = vbcast.lane.b32.xlu0 %v580, 256
    %v583 = vpop.permute.xlu0 %582
    %v584 = vlaneseq
    %v585 = vshrl.u32 %v584, 7
    %v586 = vsub.s32 3, %v585
    %v587 = vrot.slane %v561, %v586
    %589 = vbcast.lane.b32.xlu0 %v587, 256
    %v590 = vpop.permute.xlu0 %589
    %v591 = vlaneseq
    %v592 = vshrl.u32 %v591, 7
    %v593 = vsub.s32 4, %v592
    %v594 = vrot.slane %v561, %v593
    %596 = vbcast.lane.b32.xlu0 %v594, 256
    %v597 = vpop.permute.xlu0 %596
    %v598 = vlaneseq
    %v599 = vshrl.u32 %v598, 7
    %v600 = vsub.s32 5, %v599
    %v601 = vrot.slane %v561, %v600
    %603 = vbcast.lane.b32.xlu0 %v601, 256
    %v604 = vpop.permute.xlu0 %603
    %v605 = vlaneseq
    %v606 = vshrl.u32 %v605, 7
    %v607 = vsub.s32 6, %v606
    %v608 = vrot.slane %v561, %v607
    %610 = vbcast.lane.b32.xlu0 %v608, 256
    %v611 = vpop.permute.xlu0 %610
    %v612 = vlaneseq
    %v613 = vshrl.u32 %v612, 7
    %v614 = vsub.s32 7, %v613
    %v615 = vrot.slane %v561, %v614
    %617 = vbcast.lane.b32.xlu0 %v615, 256
    %v618 = vpop.permute.xlu0 %617
    %v619 = vlaneseq
    %v620 = vshrl.u32 %v619, 7
    %v621 = vsub.s32 0, %v620
    %v622 = vrot.slane %v562, %v621
    %624 = vbcast.lane.b32.xlu0 %v622, 256
    %v625 = vpop.permute.xlu0 %624
    %v626 = vlaneseq
    %v627 = vshrl.u32 %v626, 7
    %v628 = vsub.s32 1, %v627
    %v629 = vrot.slane %v562, %v628
    %631 = vbcast.lane.b32.xlu0 %v629, 256
    %v632 = vpop.permute.xlu0 %631
    %v633 = vlaneseq
    %v634 = vshrl.u32 %v633, 7
    %v635 = vsub.s32 2, %v634
    %v636 = vrot.slane %v562, %v635
    %638 = vbcast.lane.b32.xlu0 %v636, 256
    %v639 = vpop.permute.xlu0 %638
    %v640 = vlaneseq
    %v641 = vshrl.u32 %v640, 7
    %v642 = vsub.s32 3, %v641
    %v643 = vrot.slane %v562, %v642
    %645 = vbcast.lane.b32.xlu0 %v643, 256
    %v646 = vpop.permute.xlu0 %645
    %v647 = vlaneseq
    %v648 = vshrl.u32 %v647, 7
    %v649 = vsub.s32 4, %v648
    %v650 = vrot.slane %v562, %v649
    %652 = vbcast.lane.b32.xlu0 %v650, 256
    %v653 = vpop.permute.xlu0 %652
    %v654 = vlaneseq
    %v655 = vshrl.u32 %v654, 7
    %v656 = vsub.s32 5, %v655
    %v657 = vrot.slane %v562, %v656
    %659 = vbcast.lane.b32.xlu0 %v657, 256
    %v660 = vpop.permute.xlu0 %659
    %v661 = vlaneseq
    %v662 = vshrl.u32 %v661, 7
    %v663 = vsub.s32 6, %v662
    %v664 = vrot.slane %v562, %v663
    %666 = vbcast.lane.b32.xlu0 %v664, 256
    %v667 = vpop.permute.xlu0 %666
    %v668 = vlaneseq
    %v669 = vshrl.u32 %v668, 7
    %v670 = vsub.s32 7, %v669
    %v671 = vrot.slane %v562, %v670
    %673 = vbcast.lane.b32.xlu0 %v671, 256
    %v674 = vpop.permute.xlu0 %673
    %vm675 = vcmp.eq.s32.totalorder %v569, %v267
    %vm676 = vcmp.eq.s32.totalorder %v576, %v267
    %vm677 = vcmp.eq.s32.totalorder %v583, %v267
    %vm678 = vcmp.eq.s32.totalorder %v590, %v267
    %vm679 = vcmp.eq.s32.totalorder %v597, %v267
    %vm680 = vcmp.eq.s32.totalorder %v604, %v267
    %vm681 = vcmp.eq.s32.totalorder %v611, %v267
    %vm682 = vcmp.eq.s32.totalorder %v618, %v267
    %vm683 = vcmp.eq.s32.totalorder %v625, %v267
    %vm684 = vcmp.eq.s32.totalorder %v632, %v267
    %vm685 = vcmp.eq.s32.totalorder %v639, %v267
    %vm686 = vcmp.eq.s32.totalorder %v646, %v267
    %vm687 = vcmp.eq.s32.totalorder %v653, %v267
    %vm688 = vcmp.eq.s32.totalorder %v660, %v267
    %vm689 = vcmp.eq.s32.totalorder %v667, %v267
    %vm690 = vcmp.eq.s32.totalorder %v674, %v267
    %v691 = vsel %vm675, 1, 0
    %v692 = vsel %vm676, 1, 0
    %v693 = vsel %vm677, 1, 0
    %v694 = vsel %vm678, 1, 0
    %v695 = vsel %vm679, 1, 0
    %v696 = vsel %vm680, 1, 0
    %v697 = vsel %vm681, 1, 0
    %v698 = vsel %vm682, 1, 0
    %v699 = vsel %vm683, 1, 0
    %v700 = vsel %vm684, 1, 0
    %v701 = vsel %vm685, 1, 0
    %v702 = vsel %vm686, 1, 0
    %v703 = vsel %vm687, 1, 0
    %v704 = vsel %vm688, 1, 0
    %v705 = vsel %vm689, 1, 0
    %v706 = vsel %vm690, 1, 0
    %v707 = vcvt.s32.f32 %v691
    %v708 = vcvt.s32.f32 %v692
    %v709 = vcvt.s32.f32 %v693
    %v710 = vcvt.s32.f32 %v694
    %v711 = vcvt.s32.f32 %v695
    %v712 = vcvt.s32.f32 %v696
    %v713 = vcvt.s32.f32 %v697
    %v714 = vcvt.s32.f32 %v698
    %v715 = vcvt.s32.f32 %v699
    %v716 = vcvt.s32.f32 %v700
    %v717 = vcvt.s32.f32 %v701
    %v718 = vcvt.s32.f32 %v702
    %v719 = vcvt.s32.f32 %v703
    %v720 = vcvt.s32.f32 %v704
    %v721 = vcvt.s32.f32 %v705
    %v722 = vcvt.s32.f32 %v706
    %v725 = vcombine.high %v553, %v553
    %v727 = vunpack.c.l.s4 1966171168
    %v728 = vunpack.c.0.s8 %v727
    %v729 = vlaneseq
    %v730 = vshrl.u32 %v729, 7
    %v731 = vsub.s32 %v728, %v730
    %v732 = vrot.slane %v553, %v731
    %v734 = vunpack.c.l.s4 1966171168
    %v735 = vunpack.c.0.s8 %v734
    %v736 = vlaneseq
    %v737 = vshrl.u32 %v736, 7
    %v738 = vsub.s32 %v735, %v737
    %v739 = vrot.slane %v725, %v738
    %v740 = vcombine.high %v732, %v732
    %v741 = vcombine.high %v739, %v739
    %v743 = vunpack.c.l.s4 1966171168
    %v744 = vunpack.c.0.s8 %v743
    %v745 = vlaneseq
    %v746 = vshrl.u32 %v745, 7
    %v747 = vsub.s32 %v744, %v746
    %v748 = vrot.slane %v732, %v747
    %v750 = vunpack.c.l.s4 1966171168
    %v751 = vunpack.c.0.s8 %v750
    %v752 = vlaneseq
    %v753 = vshrl.u32 %v752, 7
    %v754 = vsub.s32 %v751, %v753
    %v755 = vrot.slane %v739, %v754
    %v757 = vunpack.c.l.s4 1966171168
    %v758 = vunpack.c.0.s8 %v757
    %v759 = vlaneseq
    %v760 = vshrl.u32 %v759, 7
    %v761 = vsub.s32 %v758, %v760
    %v762 = vrot.slane %v740, %v761
    %v764 = vunpack.c.l.s4 1966171168
    %v765 = vunpack.c.0.s8 %v764
    %v766 = vlaneseq
    %v767 = vshrl.u32 %v766, 7
    %v768 = vsub.s32 %v765, %v767
    %v769 = vrot.slane %v741, %v768
    %v770 = vcombine.high %v748, %v748
    %v771 = vcombine.high %v755, %v755
    %v772 = vcombine.high %v762, %v762
    %v773 = vcombine.high %v769, %v769
    %v774 = vcombine.high %v558, %v558
    %v776 = vunpack.c.l.s4 1966171168
    %v777 = vunpack.c.0.s8 %v776
    %v778 = vlaneseq
    %v779 = vshrl.u32 %v778, 7
    %v780 = vsub.s32 %v777, %v779
    %v781 = vrot.slane %v558, %v780
    %v783 = vunpack.c.l.s4 1966171168
    %v784 = vunpack.c.0.s8 %v783
    %v785 = vlaneseq
    %v786 = vshrl.u32 %v785, 7
    %v787 = vsub.s32 %v784, %v786
    %v788 = vrot.slane %v774, %v787
    %v789 = vcombine.high %v781, %v781
    %v790 = vcombine.high %v788, %v788
    %v792 = vunpack.c.l.s4 1966171168
    %v793 = vunpack.c.0.s8 %v792
    %v794 = vlaneseq
    %v795 = vshrl.u32 %v794, 7
    %v796 = vsub.s32 %v793, %v795
    %v797 = vrot.slane %v781, %v796
    %v799 = vunpack.c.l.s4 1966171168
    %v800 = vunpack.c.0.s8 %v799
    %v801 = vlaneseq
    %v802 = vshrl.u32 %v801, 7
    %v803 = vsub.s32 %v800, %v802
    %v804 = vrot.slane %v788, %v803
    %v806 = vunpack.c.l.s4 1966171168
    %v807 = vunpack.c.0.s8 %v806
    %v808 = vlaneseq
    %v809 = vshrl.u32 %v808, 7
    %v810 = vsub.s32 %v807, %v809
    %v811 = vrot.slane %v789, %v810
    %v813 = vunpack.c.l.s4 1966171168
    %v814 = vunpack.c.0.s8 %v813
    %v815 = vlaneseq
    %v816 = vshrl.u32 %v815, 7
    %v817 = vsub.s32 %v814, %v816
    %v818 = vrot.slane %v790, %v817
    %v819 = vcombine.high %v797, %v797
    %v820 = vcombine.high %v804, %v804
    %v821 = vcombine.high %v811, %v811
    %v822 = vcombine.high %v818, %v818
    %v823 = vlaneseq
    %v824 = vshrl.u32 %v823, 7
    %v825 = vsub.s32 0, %v824
    %v826 = vrot.slane %v748, %v825
    %v827 = vlaneseq
    %v828 = vshrl.u32 %v827, 7
    %v829 = vsub.s32 0, %v828
    %v830 = vrot.slane %v762, %v829
    %v831 = vlaneseq
    %v832 = vshrl.u32 %v831, 7
    %v833 = vsub.s32 0, %v832
    %v834 = vrot.slane %v770, %v833
    %v835 = vlaneseq
    %v836 = vshrl.u32 %v835, 7
    %v837 = vsub.s32 0, %v836
    %v838 = vrot.slane %v772, %v837
    %v839 = vlaneseq
    %v840 = vshrl.u32 %v839, 7
    %v841 = vsub.s32 0, %v840
    %v842 = vrot.slane %v755, %v841
    %v843 = vlaneseq
    %v844 = vshrl.u32 %v843, 7
    %v845 = vsub.s32 0, %v844
    %v846 = vrot.slane %v769, %v845
    %v847 = vlaneseq
    %v848 = vshrl.u32 %v847, 7
    %v849 = vsub.s32 0, %v848
    %v850 = vrot.slane %v771, %v849
    %v851 = vlaneseq
    %v852 = vshrl.u32 %v851, 7
    %v853 = vsub.s32 0, %v852
    %v854 = vrot.slane %v773, %v853
    %v855 = vlaneseq
    %v856 = vshrl.u32 %v855, 7
    %v857 = vsub.s32 0, %v856
    %v858 = vrot.slane %v797, %v857
    %v859 = vlaneseq
    %v860 = vshrl.u32 %v859, 7
    %v861 = vsub.s32 0, %v860
    %v862 = vrot.slane %v811, %v861
    %v863 = vlaneseq
    %v864 = vshrl.u32 %v863, 7
    %v865 = vsub.s32 0, %v864
    %v866 = vrot.slane %v819, %v865
    %v867 = vlaneseq
    %v868 = vshrl.u32 %v867, 7
    %v869 = vsub.s32 0, %v868
    %v870 = vrot.slane %v821, %v869
    %v871 = vlaneseq
    %v872 = vshrl.u32 %v871, 7
    %v873 = vsub.s32 0, %v872
    %v874 = vrot.slane %v804, %v873
    %v875 = vlaneseq
    %v876 = vshrl.u32 %v875, 7
    %v877 = vsub.s32 0, %v876
    %v878 = vrot.slane %v818, %v877
    %v879 = vlaneseq
    %v880 = vshrl.u32 %v879, 7
    %v881 = vsub.s32 0, %v880
    %v882 = vrot.slane %v820, %v881
    %v883 = vlaneseq
    %v884 = vshrl.u32 %v883, 7
    %v885 = vsub.s32 0, %v884
    %v886 = vrot.slane %v822, %v885
    %v903 = vmul.f32 %v707, %v826
    %v904 = vmul.f32 %v708, %v830
    %v905 = vmul.f32 %v709, %v834
    %v906 = vmul.f32 %v710, %v838
    %v907 = vmul.f32 %v711, %v842
    %v908 = vmul.f32 %v712, %v846
    %v909 = vmul.f32 %v713, %v850
    %v910 = vmul.f32 %v714, %v854
    %v911 = vmul.f32 %v715, %v858
    %v912 = vmul.f32 %v716, %v862
    %v913 = vmul.f32 %v717, %v866
    %v914 = vmul.f32 %v718, %v870
    %v915 = vmul.f32 %v719, %v874
    %v916 = vmul.f32 %v720, %v878
    %v917 = vmul.f32 %v721, %v882
    %v918 = vmul.f32 %v722, %v886
    %vm919 = vcmask 138240
    %v920 = vsel %vm919, %v903, 0.0
    %921 = vadd.xlane.f32.xlu0 %v920
    %v922 = vpop.xlane.xlu0 %921
    %v923 = vsel %vm919, %v904, 0.0
    %924 = vadd.xlane.f32.xlu0 %v923
    %v925 = vpop.xlane.xlu0 %924
    %v926 = vsel %vm919, %v905, 0.0
    %927 = vadd.xlane.f32.xlu0 %v926
    %v928 = vpop.xlane.xlu0 %927
    %v929 = vsel %vm919, %v906, 0.0
    %930 = vadd.xlane.f32.xlu0 %v929
    %v931 = vpop.xlane.xlu0 %930
    %v932 = vsel %vm919, %v907, 0.0
    %933 = vadd.xlane.f32.xlu0 %v932
    %v934 = vpop.xlane.xlu0 %933
    %v935 = vsel %vm919, %v908, 0.0
    %936 = vadd.xlane.f32.xlu0 %v935
    %v937 = vpop.xlane.xlu0 %936
    %v938 = vsel %vm919, %v909, 0.0
    %939 = vadd.xlane.f32.xlu0 %v938
    %v940 = vpop.xlane.xlu0 %939
    %v941 = vsel %vm919, %v910, 0.0
    %942 = vadd.xlane.f32.xlu0 %v941
    %v943 = vpop.xlane.xlu0 %942
    %v944 = vsel %vm919, %v911, 0.0
    %945 = vadd.xlane.f32.xlu0 %v944
    %v946 = vpop.xlane.xlu0 %945
    %v947 = vsel %vm919, %v912, 0.0
    %948 = vadd.xlane.f32.xlu0 %v947
    %v949 = vpop.xlane.xlu0 %948
    %v950 = vsel %vm919, %v913, 0.0
    %951 = vadd.xlane.f32.xlu0 %v950
    %v952 = vpop.xlane.xlu0 %951
    %v953 = vsel %vm919, %v914, 0.0
    %954 = vadd.xlane.f32.xlu0 %v953
    %v955 = vpop.xlane.xlu0 %954
    %v956 = vsel %vm919, %v915, 0.0
    %957 = vadd.xlane.f32.xlu0 %v956
    %v958 = vpop.xlane.xlu0 %957
    %v959 = vsel %vm919, %v916, 0.0
    %960 = vadd.xlane.f32.xlu0 %v959
    %v961 = vpop.xlane.xlu0 %960
    %v962 = vsel %vm919, %v917, 0.0
    %963 = vadd.xlane.f32.xlu0 %v962
    %v964 = vpop.xlane.xlu0 %963
    %v965 = vsel %vm919, %v918, 0.0
    %966 = vadd.xlane.f32.xlu0 %v965
    %v967 = vpop.xlane.xlu0 %966
    %969 = vrot.lane.b32.xlu0 %v456, 96
    %v970 = vpop.permute.xlu0 %969
    %v979 = vlaneseq
    %v980 = vshrl.u32 %v979, 7
    %v981 = vsub.s32 %v267, %v980
    %v982 = vrot.slane %v922, %v981
    %v983 = vlaneseq
    %v984 = vshrl.u32 %v983, 7
    %v985 = vsub.s32 %v267, %v984
    %v986 = vrot.slane %v925, %v985
    %v987 = vlaneseq
    %v988 = vshrl.u32 %v987, 7
    %v989 = vsub.s32 %v267, %v988
    %v990 = vrot.slane %v928, %v989
    %v991 = vlaneseq
    %v992 = vshrl.u32 %v991, 7
    %v993 = vsub.s32 %v267, %v992
    %v994 = vrot.slane %v931, %v993
    %v995 = vlaneseq
    %v996 = vshrl.u32 %v995, 7
    %v997 = vsub.s32 %v267, %v996
    %v998 = vrot.slane %v934, %v997
    %v999 = vlaneseq
    %v1000 = vshrl.u32 %v999, 7
    %v1001 = vsub.s32 %v267, %v1000
    %v1002 = vrot.slane %v937, %v1001
    %v1003 = vlaneseq
    %v1004 = vshrl.u32 %v1003, 7
    %v1005 = vsub.s32 %v267, %v1004
    %v1006 = vrot.slane %v940, %v1005
    %v1007 = vlaneseq
    %v1008 = vshrl.u32 %v1007, 7
    %v1009 = vsub.s32 %v267, %v1008
    %v1010 = vrot.slane %v943, %v1009
    %vm1011 = vcmask 1041409
    %v1012 = vsel %vm1011, %v986, %v982
    %vm1013 = vcmask 1042434
    %v1014 = vsel %vm1013, %v990, %v1012
    %vm1015 = vcmask 1043459
    %v1016 = vsel %vm1015, %v994, %v1014
    %vm1017 = vcmask 1044484
    %v1018 = vsel %vm1017, %v998, %v1016
    %vm1019 = vcmask 1045509
    %v1020 = vsel %vm1019, %v1002, %v1018
    %vm1021 = vcmask 1046534
    %v1022 = vsel %vm1021, %v1006, %v1020
    %vm1023 = vcmask 1047559
    %v1024 = vsel %vm1023, %v1010, %v1022
    %v1026 = vsel %vm182, %v970, 0
    %1028 = vmatprep.subr.mxu0 0.0
    %1029 = vmatpush1.xpose.msra.mxu0 0.0
    %1030 = vmatprep.subr.mxu0 0.0
    %1031 = vmatpush1.xpose.msra.mxu0 0.0
    %1032 = vmatprep.subr.mxu0 0.0
    %1033 = vmatpush1.xpose.msra.mxu0 0.0
    %1034 = vmatprep.subr.mxu0 0.0
    %1035 = vmatpush1.xpose.msra.mxu0 0.0
    %1036 = vmatprep.subr.mxu0 0.0
    %1037 = vmatpush1.xpose.msra.mxu0 0.0
    %1038 = vmatprep.subr.mxu0 0.0
    %1039 = vmatpush1.xpose.msra.mxu0 0.0
    %1040 = vmatprep.subr.mxu0 0.0
    %1041 = vmatpush1.xpose.msra.mxu0 0.0
    %1042 = vmatprep.subr.mxu0 0.0
    %1043 = vmatpush1.xpose.msra.mxu0 0.0
    %1044 = vmatprep.subr.mxu0 0.0
    %1045 = vmatpush1.xpose.msra.mxu0 0.0
    %1046 = vmatprep.subr.mxu0 0.0
    %1047 = vmatpush1.xpose.msra.mxu0 0.0
    %1048 = vmatprep.subr.mxu0 0.0
    %1049 = vmatpush1.xpose.msra.mxu0 0.0
    %1050 = vmatprep.subr.mxu0 0.0
    %1051 = vmatpush1.xpose.msra.mxu0 0.0
    %1052 = vmatprep.subr.mxu0 0.0
    %1053 = vmatpush1.xpose.msra.mxu0 0.0
    %1054 = vmatprep.subr.mxu0 0.0
    %1055 = vmatpush1.xpose.msra.mxu0 0.0
    %1056 = vmatprep.subr.mxu0 0.0
    %1057 = vmatpush1.xpose.msra.mxu0 0.0
    %1058 = vmatprep.subr.mxu0 0.0
    %1059 = vmatpush1.xpose.msra.mxu0 %v1026
    %1060 = vmatprep.subr.mxu0 0.0
    %1061 = vmatpush2.xpose.msra.mxu0 0.0
    %1062 = vmatprep.subr.mxu0 0.0
    %1063 = vmatpush2.xpose.msra.mxu0 0.0
    %1064 = vmatprep.subr.mxu0 0.0
    %1065 = vmatpush2.xpose.msra.mxu0 0.0
    %1066 = vmatprep.subr.mxu0 0.0
    %1067 = vmatpush2.xpose.msra.mxu0 0.0
    %1068 = vmatprep.subr.mxu0 0.0
    %1069 = vmatpush2.xpose.msra.mxu0 0.0
    %1070 = vmatprep.subr.mxu0 0.0
    %1071 = vmatpush2.xpose.msra.mxu0 0.0
    %1072 = vmatprep.subr.mxu0 0.0
    %1073 = vmatpush2.xpose.msra.mxu0 0.0
    %1074 = vmatprep.subr.mxu0 0.0
    %1075 = vmatpush2.xpose.msra.mxu0 0.0
    %1076 = vmatprep.subr.mxu0 0.0
    %1077 = vmatpush2.xpose.msra.mxu0 0.0
    %1078 = vmatprep.subr.mxu0 0.0
    %1079 = vmatpush2.xpose.msra.mxu0 0.0
    %1080 = vmatprep.subr.mxu0 0.0
    %1081 = vmatpush2.xpose.msra.mxu0 0.0
    %1082 = vmatprep.subr.mxu0 0.0
    %1083 = vmatpush2.xpose.msra.mxu0 0.0
    %1084 = vmatprep.subr.mxu0 0.0
    %1085 = vmatpush2.xpose.msra.mxu0 0.0
    %1086 = vmatprep.subr.mxu0 0.0
    %1087 = vmatpush2.xpose.msra.mxu0 0.0
    %1088 = vmatprep.subr.mxu0 0.0
    %1089 = vmatpush2.xpose.msra.mxu0 0.0
    %1090 = vmatprep.subr.mxu0 0.0
    %1091 = vmatpush2.xpose.msra.mxu0 0.0
    %1092 = vmatprep.mubr.f32.mxu0 0.0
    %1093 = vmatmul.mubr.f32.gmra.mxu0 %v472
    %v1094 = vpop.f32.mrf.mxu0
    %v1095 = vadd.f32 %v1024, %v1094
    %v1096 = vpop.f32.mrf.mxu0
    %1097 = vdwg.mxu0
    %1099 = vrot.lane.b32.xlu0 %v457, 96
    %v1100 = vpop.permute.xlu0 %1099
    %v1109 = vlaneseq
    %v1110 = vshrl.u32 %v1109, 7
    %v1111 = vsub.s32 %v267, %v1110
    %v1112 = vrot.slane %v946, %v1111
    %v1113 = vlaneseq
    %v1114 = vshrl.u32 %v1113, 7
    %v1115 = vsub.s32 %v267, %v1114
    %v1116 = vrot.slane %v949, %v1115
    %v1117 = vlaneseq
    %v1118 = vshrl.u32 %v1117, 7
    %v1119 = vsub.s32 %v267, %v1118
    %v1120 = vrot.slane %v952, %v1119
    %v1121 = vlaneseq
    %v1122 = vshrl.u32 %v1121, 7
    %v1123 = vsub.s32 %v267, %v1122
    %v1124 = vrot.slane %v955, %v1123
    %v1125 = vlaneseq
    %v1126 = vshrl.u32 %v1125, 7
    %v1127 = vsub.s32 %v267, %v1126
    %v1128 = vrot.slane %v958, %v1127
    %v1129 = vlaneseq
    %v1130 = vshrl.u32 %v1129, 7
    %v1131 = vsub.s32 %v267, %v1130
    %v1132 = vrot.slane %v961, %v1131
    %v1133 = vlaneseq
    %v1134 = vshrl.u32 %v1133, 7
    %v1135 = vsub.s32 %v267, %v1134
    %v1136 = vrot.slane %v964, %v1135
    %v1137 = vlaneseq
    %v1138 = vshrl.u32 %v1137, 7
    %v1139 = vsub.s32 %v267, %v1138
    %v1140 = vrot.slane %v967, %v1139
    %v1141 = vsel %vm1011, %v1116, %v1112
    %v1142 = vsel %vm1013, %v1120, %v1141
    %v1143 = vsel %vm1015, %v1124, %v1142
    %v1144 = vsel %vm1017, %v1128, %v1143
    %v1145 = vsel %vm1019, %v1132, %v1144
    %v1146 = vsel %vm1021, %v1136, %v1145
    %v1147 = vsel %vm1023, %v1140, %v1146
    %v1149 = vsel %vm182, %v1100, 0
    %1151 = vmatprep.subr.mxu0 0.0
    %1152 = vmatpush1.xpose.msra.mxu0 0.0
    %1153 = vmatprep.subr.mxu0 0.0
    %1154 = vmatpush1.xpose.msra.mxu0 0.0
    %1155 = vmatprep.subr.mxu0 0.0
    %1156 = vmatpush1.xpose.msra.mxu0 0.0
    %1157 = vmatprep.subr.mxu0 0.0
    %1158 = vmatpush1.xpose.msra.mxu0 0.0
    %1159 = vmatprep.subr.mxu0 0.0
    %1160 = vmatpush1.xpose.msra.mxu0 0.0
    %1161 = vmatprep.subr.mxu0 0.0
    %1162 = vmatpush1.xpose.msra.mxu0 0.0
    %1163 = vmatprep.subr.mxu0 0.0
    %1164 = vmatpush1.xpose.msra.mxu0 0.0
    %1165 = vmatprep.subr.mxu0 0.0
    %1166 = vmatpush1.xpose.msra.mxu0 0.0
    %1167 = vmatprep.subr.mxu0 0.0
    %1168 = vmatpush1.xpose.msra.mxu0 0.0
    %1169 = vmatprep.subr.mxu0 0.0
    %1170 = vmatpush1.xpose.msra.mxu0 0.0
    %1171 = vmatprep.subr.mxu0 0.0
    %1172 = vmatpush1.xpose.msra.mxu0 0.0
    %1173 = vmatprep.subr.mxu0 0.0
    %1174 = vmatpush1.xpose.msra.mxu0 0.0
    %1175 = vmatprep.subr.mxu0 0.0
    %1176 = vmatpush1.xpose.msra.mxu0 0.0
    %1177 = vmatprep.subr.mxu0 0.0
    %1178 = vmatpush1.xpose.msra.mxu0 0.0
    %1179 = vmatprep.subr.mxu0 0.0
    %1180 = vmatpush1.xpose.msra.mxu0 0.0
    %1181 = vmatprep.subr.mxu0 0.0
    %1182 = vmatpush1.xpose.msra.mxu0 %v1149
    %1183 = vmatprep.subr.mxu0 0.0
    %1184 = vmatpush2.xpose.msra.mxu0 0.0
    %1185 = vmatprep.subr.mxu0 0.0
    %1186 = vmatpush2.xpose.msra.mxu0 0.0
    %1187 = vmatprep.subr.mxu0 0.0
    %1188 = vmatpush2.xpose.msra.mxu0 0.0
    %1189 = vmatprep.subr.mxu0 0.0
    %1190 = vmatpush2.xpose.msra.mxu0 0.0
    %1191 = vmatprep.subr.mxu0 0.0
    %1192 = vmatpush2.xpose.msra.mxu0 0.0
    %1193 = vmatprep.subr.mxu0 0.0
    %1194 = vmatpush2.xpose.msra.mxu0 0.0
    %1195 = vmatprep.subr.mxu0 0.0
    %1196 = vmatpush2.xpose.msra.mxu0 0.0
    %1197 = vmatprep.subr.mxu0 0.0
    %1198 = vmatpush2.xpose.msra.mxu0 0.0
    %1199 = vmatprep.subr.mxu0 0.0
    %1200 = vmatpush2.xpose.msra.mxu0 0.0
    %1201 = vmatprep.subr.mxu0 0.0
    %1202 = vmatpush2.xpose.msra.mxu0 0.0
    %1203 = vmatprep.subr.mxu0 0.0
    %1204 = vmatpush2.xpose.msra.mxu0 0.0
    %1205 = vmatprep.subr.mxu0 0.0
    %1206 = vmatpush2.xpose.msra.mxu0 0.0
    %1207 = vmatprep.subr.mxu0 0.0
    %1208 = vmatpush2.xpose.msra.mxu0 0.0
    %1209 = vmatprep.subr.mxu0 0.0
    %1210 = vmatpush2.xpose.msra.mxu0 0.0
    %1211 = vmatprep.subr.mxu0 0.0
    %1212 = vmatpush2.xpose.msra.mxu0 0.0
    %1213 = vmatprep.subr.mxu0 0.0
    %1214 = vmatpush2.xpose.msra.mxu0 0.0
    %1215 = vmatprep.mubr.f32.mxu0 0.0
    %1216 = vmatmul.mubr.f32.gmra.mxu0 %v475
    %v1217 = vpop.f32.mrf.mxu0
    %v1218 = vadd.f32 %v1147, %v1217
    %v1219 = vpop.f32.mrf.mxu0
    %1220 = vdwg.mxu0
    %v1221 = vmul.f32 %v1095, 0.17677669
    %v1222 = vmul.f32 %v1218, 0.17677669
    %v1223 = vlaneseq
    %v1224 = vshrl.u32 %v1223, 7
    %vm1225 = vcmp.ge.s32.totalorder %v1224, %v267
    %v1226 = vsel %vm1225, %v1221, -1e+30
    %v1227 = vsel %vm1225, %v1222, -1e+30
    %vm1228 = vcmask 64512
    %v1229 = vsel %vm1228, %v1226, -inf
    %1230 = vmax.xlane.f32.xlu0 %v1229
    %v1231 = vpop.xlane.xlu0 %1230
    %v1232 = vsel %vm1228, %v1227, -inf
    %1233 = vmax.xlane.f32.xlu0 %v1232
    %v1234 = vpop.xlane.xlu0 %1233
    %v1235 = vsub.f32 %v1226, %v1231
    %v1236 = vsub.f32 %v1227, %v1234
    %v1237 = vmul.f32 %v1235, 1.442695
    %v1238 = vpow.pop %v1237
    %v1239 = vmul.f32 %v1236, 1.442695
    %v1240 = vpow.pop %v1239
    %v1241 = vsel %vm1228, %v1238, 0.0
    %1242 = vadd.xlane.f32.xlu0 %v1241
    %v1243 = vpop.xlane.xlu0 %1242
    %v1244 = vsel %vm1228, %v1240, 0.0
    %1245 = vadd.xlane.f32.xlu0 %v1244
    %v1246 = vpop.xlane.xlu0 %1245
    %v1247 = vrcp.pop %v1243
    %v1248 = vrcp.pop %v1246
    %v1249 = vmul.f32 %v1238, %v1247
    %v1250 = vmul.f32 %v1240, %v1248
    %v1251 = vlaneseq
    %v1252 = vshrl.u32 %v1251, 7
    %v1253 = vsub.s32 0, %v1252
    %v1254 = vrot.slane %v1249, %v1253
    %1256 = vbcast.lane.b32.xlu0 %v1254, 256
    %v1257 = vpop.permute.xlu0 %1256
    %v1258 = vlaneseq
    %v1259 = vshrl.u32 %v1258, 7
    %v1260 = vsub.s32 1, %v1259
    %v1261 = vrot.slane %v1249, %v1260
    %1263 = vbcast.lane.b32.xlu0 %v1261, 256
    %v1264 = vpop.permute.xlu0 %1263
    %v1265 = vlaneseq
    %v1266 = vshrl.u32 %v1265, 7
    %v1267 = vsub.s32 2, %v1266
    %v1268 = vrot.slane %v1249, %v1267
    %1270 = vbcast.lane.b32.xlu0 %v1268, 256
    %v1271 = vpop.permute.xlu0 %1270
    %v1272 = vlaneseq
    %v1273 = vshrl.u32 %v1272, 7
    %v1274 = vsub.s32 3, %v1273
    %v1275 = vrot.slane %v1249, %v1274
    %1277 = vbcast.lane.b32.xlu0 %v1275, 256
    %v1278 = vpop.permute.xlu0 %1277
    %v1279 = vlaneseq
    %v1280 = vshrl.u32 %v1279, 7
    %v1281 = vsub.s32 4, %v1280
    %v1282 = vrot.slane %v1249, %v1281
    %1284 = vbcast.lane.b32.xlu0 %v1282, 256
    %v1285 = vpop.permute.xlu0 %1284
    %v1286 = vlaneseq
    %v1287 = vshrl.u32 %v1286, 7
    %v1288 = vsub.s32 5, %v1287
    %v1289 = vrot.slane %v1249, %v1288
    %1291 = vbcast.lane.b32.xlu0 %v1289, 256
    %v1292 = vpop.permute.xlu0 %1291
    %v1293 = vlaneseq
    %v1294 = vshrl.u32 %v1293, 7
    %v1295 = vsub.s32 6, %v1294
    %v1296 = vrot.slane %v1249, %v1295
    %1298 = vbcast.lane.b32.xlu0 %v1296, 256
    %v1299 = vpop.permute.xlu0 %1298
    %v1300 = vlaneseq
    %v1301 = vshrl.u32 %v1300, 7
    %v1302 = vsub.s32 7, %v1301
    %v1303 = vrot.slane %v1249, %v1302
    %1305 = vbcast.lane.b32.xlu0 %v1303, 256
    %v1306 = vpop.permute.xlu0 %1305
    %v1307 = vlaneseq
    %v1308 = vshrl.u32 %v1307, 7
    %v1309 = vsub.s32 0, %v1308
    %v1310 = vrot.slane %v1250, %v1309
    %1312 = vbcast.lane.b32.xlu0 %v1310, 256
    %v1313 = vpop.permute.xlu0 %1312
    %v1314 = vlaneseq
    %v1315 = vshrl.u32 %v1314, 7
    %v1316 = vsub.s32 1, %v1315
    %v1317 = vrot.slane %v1250, %v1316
    %1319 = vbcast.lane.b32.xlu0 %v1317, 256
    %v1320 = vpop.permute.xlu0 %1319
    %v1321 = vlaneseq
    %v1322 = vshrl.u32 %v1321, 7
    %v1323 = vsub.s32 2, %v1322
    %v1324 = vrot.slane %v1250, %v1323
    %1326 = vbcast.lane.b32.xlu0 %v1324, 256
    %v1327 = vpop.permute.xlu0 %1326
    %v1328 = vlaneseq
    %v1329 = vshrl.u32 %v1328, 7
    %v1330 = vsub.s32 3, %v1329
    %v1331 = vrot.slane %v1250, %v1330
    %1333 = vbcast.lane.b32.xlu0 %v1331, 256
    %v1334 = vpop.permute.xlu0 %1333
    %v1335 = vlaneseq
    %v1336 = vshrl.u32 %v1335, 7
    %v1337 = vsub.s32 4, %v1336
    %v1338 = vrot.slane %v1250, %v1337
    %1340 = vbcast.lane.b32.xlu0 %v1338, 256
    %v1341 = vpop.permute.xlu0 %1340
    %v1342 = vlaneseq
    %v1343 = vshrl.u32 %v1342, 7
    %v1344 = vsub.s32 5, %v1343
    %v1345 = vrot.slane %v1250, %v1344
    %1347 = vbcast.lane.b32.xlu0 %v1345, 256
    %v1348 = vpop.permute.xlu0 %1347
    %v1349 = vlaneseq
    %v1350 = vshrl.u32 %v1349, 7
    %v1351 = vsub.s32 6, %v1350
    %v1352 = vrot.slane %v1250, %v1351
    %1354 = vbcast.lane.b32.xlu0 %v1352, 256
    %v1355 = vpop.permute.xlu0 %1354
    %v1356 = vlaneseq
    %v1357 = vshrl.u32 %v1356, 7
    %v1358 = vsub.s32 7, %v1357
    %v1359 = vrot.slane %v1250, %v1358
    %1361 = vbcast.lane.b32.xlu0 %v1359, 256
    %v1362 = vpop.permute.xlu0 %1361
    %v1363 = vmul.f32 %v1257, %v707
    %v1364 = vmul.f32 %v1264, %v708
    %v1365 = vmul.f32 %v1271, %v709
    %v1366 = vmul.f32 %v1278, %v710
    %v1367 = vmul.f32 %v1285, %v711
    %v1368 = vmul.f32 %v1292, %v712
    %v1369 = vmul.f32 %v1299, %v713
    %v1370 = vmul.f32 %v1306, %v714
    %v1371 = vmul.f32 %v1313, %v715
    %v1372 = vmul.f32 %v1320, %v716
    %v1373 = vmul.f32 %v1327, %v717
    %v1374 = vmul.f32 %v1334, %v718
    %v1375 = vmul.f32 %v1341, %v719
    %v1376 = vmul.f32 %v1348, %v720
    %v1377 = vmul.f32 %v1355, %v721
    %v1378 = vmul.f32 %v1362, %v722
    %v1379 = vsel %vm919, %v1363, 0.0
    %v1380 = vrot.slane %v1379, 4
    %v1381 = vadd.f32 %v1379, %v1380
    %v1382 = vrot.slane %v1381, 2
    %v1383 = vadd.f32 %v1381, %v1382
    %v1384 = vrot.slane %v1383, 1
    %v1385 = vadd.f32 %v1383, %v1384
    %v1386 = vsel %vm919, %v1364, 0.0
    %v1387 = vrot.slane %v1386, 4
    %v1388 = vadd.f32 %v1386, %v1387
    %v1389 = vrot.slane %v1388, 2
    %v1390 = vadd.f32 %v1388, %v1389
    %v1391 = vrot.slane %v1390, 1
    %v1392 = vadd.f32 %v1390, %v1391
    %v1393 = vsel %vm919, %v1365, 0.0
    %v1394 = vrot.slane %v1393, 4
    %v1395 = vadd.f32 %v1393, %v1394
    %v1396 = vrot.slane %v1395, 2
    %v1397 = vadd.f32 %v1395, %v1396
    %v1398 = vrot.slane %v1397, 1
    %v1399 = vadd.f32 %v1397, %v1398
    %v1400 = vsel %vm919, %v1366, 0.0
    %v1401 = vrot.slane %v1400, 4
    %v1402 = vadd.f32 %v1400, %v1401
    %v1403 = vrot.slane %v1402, 2
    %v1404 = vadd.f32 %v1402, %v1403
    %v1405 = vrot.slane %v1404, 1
    %v1406 = vadd.f32 %v1404, %v1405
    %v1407 = vsel %vm919, %v1367, 0.0
    %v1408 = vrot.slane %v1407, 4
    %v1409 = vadd.f32 %v1407, %v1408
    %v1410 = vrot.slane %v1409, 2
    %v1411 = vadd.f32 %v1409, %v1410
    %v1412 = vrot.slane %v1411, 1
    %v1413 = vadd.f32 %v1411, %v1412
    %v1414 = vsel %vm919, %v1368, 0.0
    %v1415 = vrot.slane %v1414, 4
    %v1416 = vadd.f32 %v1414, %v1415
    %v1417 = vrot.slane %v1416, 2
    %v1418 = vadd.f32 %v1416, %v1417
    %v1419 = vrot.slane %v1418, 1
    %v1420 = vadd.f32 %v1418, %v1419
    %v1421 = vsel %vm919, %v1369, 0.0
    %v1422 = vrot.slane %v1421, 4
    %v1423 = vadd.f32 %v1421, %v1422
    %v1424 = vrot.slane %v1423, 2
    %v1425 = vadd.f32 %v1423, %v1424
    %v1426 = vrot.slane %v1425, 1
    %v1427 = vadd.f32 %v1425, %v1426
    %v1428 = vsel %vm919, %v1370, 0.0
    %v1429 = vrot.slane %v1428, 4
    %v1430 = vadd.f32 %v1428, %v1429
    %v1431 = vrot.slane %v1430, 2
    %v1432 = vadd.f32 %v1430, %v1431
    %v1433 = vrot.slane %v1432, 1
    %v1434 = vadd.f32 %v1432, %v1433
    %v1435 = vsel %vm919, %v1371, 0.0
    %v1436 = vrot.slane %v1435, 4
    %v1437 = vadd.f32 %v1435, %v1436
    %v1438 = vrot.slane %v1437, 2
    %v1439 = vadd.f32 %v1437, %v1438
    %v1440 = vrot.slane %v1439, 1
    %v1441 = vadd.f32 %v1439, %v1440
    %v1442 = vsel %vm919, %v1372, 0.0
    %v1443 = vrot.slane %v1442, 4
    %v1444 = vadd.f32 %v1442, %v1443
    %v1445 = vrot.slane %v1444, 2
    %v1446 = vadd.f32 %v1444, %v1445
    %v1447 = vrot.slane %v1446, 1
    %v1448 = vadd.f32 %v1446, %v1447
    %v1449 = vsel %vm919, %v1373, 0.0
    %v1450 = vrot.slane %v1449, 4
    %v1451 = vadd.f32 %v1449, %v1450
    %v1452 = vrot.slane %v1451, 2
    %v1453 = vadd.f32 %v1451, %v1452
    %v1454 = vrot.slane %v1453, 1
    %v1455 = vadd.f32 %v1453, %v1454
    %v1456 = vsel %vm919, %v1374, 0.0
    %v1457 = vrot.slane %v1456, 4
    %v1458 = vadd.f32 %v1456, %v1457
    %v1459 = vrot.slane %v1458, 2
    %v1460 = vadd.f32 %v1458, %v1459
    %v1461 = vrot.slane %v1460, 1
    %v1462 = vadd.f32 %v1460, %v1461
    %v1463 = vsel %vm919, %v1375, 0.0
    %v1464 = vrot.slane %v1463, 4
    %v1465 = vadd.f32 %v1463, %v1464
    %v1466 = vrot.slane %v1465, 2
    %v1467 = vadd.f32 %v1465, %v1466
    %v1468 = vrot.slane %v1467, 1
    %v1469 = vadd.f32 %v1467, %v1468
    %v1470 = vsel %vm919, %v1376, 0.0
    %v1471 = vrot.slane %v1470, 4
    %v1472 = vadd.f32 %v1470, %v1471
    %v1473 = vrot.slane %v1472, 2
    %v1474 = vadd.f32 %v1472, %v1473
    %v1475 = vrot.slane %v1474, 1
    %v1476 = vadd.f32 %v1474, %v1475
    %v1477 = vsel %vm919, %v1377, 0.0
    %v1478 = vrot.slane %v1477, 4
    %v1479 = vadd.f32 %v1477, %v1478
    %v1480 = vrot.slane %v1479, 2
    %v1481 = vadd.f32 %v1479, %v1480
    %v1482 = vrot.slane %v1481, 1
    %v1483 = vadd.f32 %v1481, %v1482
    %v1484 = vsel %vm919, %v1378, 0.0
    %v1485 = vrot.slane %v1484, 4
    %v1486 = vadd.f32 %v1484, %v1485
    %v1487 = vrot.slane %v1486, 2
    %v1488 = vadd.f32 %v1486, %v1487
    %v1489 = vrot.slane %v1488, 1
    %v1490 = vadd.f32 %v1488, %v1489
    %v1491 = vld [vmem:[#allocation13] sm:$0xff]
    %v1492 = vld [vmem:[#allocation13 + $0x8] sm:$0xff]
    %v1493 = vld [vmem:[#allocation13 + $0x10] sm:$0x1]
    %v1510 = vsel %vm1011, %v1392, %v1385
    %v1511 = vsel %vm1013, %v1399, %v1510
    %v1512 = vsel %vm1015, %v1406, %v1511
    %v1513 = vsel %vm1017, %v1413, %v1512
    %v1514 = vsel %vm1019, %v1420, %v1513
    %v1515 = vsel %vm1021, %v1427, %v1514
    %v1516 = vsel %vm1023, %v1434, %v1515
    %v1517 = vsel %vm1011, %v1448, %v1441
    %v1518 = vsel %vm1013, %v1455, %v1517
    %v1519 = vsel %vm1015, %v1462, %v1518
    %v1520 = vsel %vm1017, %v1469, %v1519
    %v1521 = vsel %vm1019, %v1476, %v1520
    %v1522 = vsel %vm1021, %v1483, %v1521
    %v1523 = vsel %vm1023, %v1490, %v1522
    %v1524 = vsel %vm919, %v1516, 0
    %v1526 = vsel %vm919, %v1523, 0
    %v1529 = vsel %vm289, %v1493, 0
    %1531 = vmatprep.subr.mxu0 0.0
    %1532 = vmatpush1.msra.mxu0 0.0
    %1533 = vmatprep.subr.mxu0 0.0
    %1534 = vmatpush1.msra.mxu0 0.0
    %1535 = vmatprep.subr.mxu0 0.0
    %1536 = vmatpush1.msra.mxu0 0.0
    %1537 = vmatprep.subr.mxu0 0.0
    %1538 = vmatpush1.msra.mxu0 0.0
    %1539 = vmatprep.subr.mxu0 0.0
    %1540 = vmatpush1.msra.mxu0 0.0
    %1541 = vmatprep.subr.mxu0 0.0
    %1542 = vmatpush1.msra.mxu0 0.0
    %1543 = vmatprep.subr.mxu0 0.0
    %1544 = vmatpush1.msra.mxu0 0.0
    %1545 = vmatprep.subr.mxu0 0.0
    %1546 = vmatpush1.msra.mxu0 0.0
    %1547 = vmatprep.subr.mxu0 0.0
    %1548 = vmatpush1.msra.mxu0 0.0
    %1549 = vmatprep.subr.mxu0 0.0
    %1550 = vmatpush1.msra.mxu0 0.0
    %1551 = vmatprep.subr.mxu0 0.0
    %1552 = vmatpush1.msra.mxu0 0.0
    %1553 = vmatprep.subr.mxu0 0.0
    %1554 = vmatpush1.msra.mxu0 0.0
    %1555 = vmatprep.subr.mxu0 0.0
    %1556 = vmatpush1.msra.mxu0 0.0
    %1557 = vmatprep.subr.mxu0 0.0
    %1558 = vmatpush1.msra.mxu0 %v1529
    %1559 = vmatprep.subr.mxu0 0.0
    %1560 = vmatpush1.msra.mxu0 %v1492
    %1561 = vmatprep.subr.mxu0 0.0
    %1562 = vmatpush1.msra.mxu0 %v1491
    %1563 = vmatprep.subr.mxu0 0.0
    %1564 = vmatpush2.msra.mxu0 0.0
    %1565 = vmatprep.subr.mxu0 0.0
    %1566 = vmatpush2.msra.mxu0 0.0
    %1567 = vmatprep.subr.mxu0 0.0
    %1568 = vmatpush2.msra.mxu0 0.0
    %1569 = vmatprep.subr.mxu0 0.0
    %1570 = vmatpush2.msra.mxu0 0.0
    %1571 = vmatprep.subr.mxu0 0.0
    %1572 = vmatpush2.msra.mxu0 0.0
    %1573 = vmatprep.subr.mxu0 0.0
    %1574 = vmatpush2.msra.mxu0 0.0
    %1575 = vmatprep.subr.mxu0 0.0
    %1576 = vmatpush2.msra.mxu0 0.0
    %1577 = vmatprep.subr.mxu0 0.0
    %1578 = vmatpush2.msra.mxu0 0.0
    %1579 = vmatprep.subr.mxu0 0.0
    %1580 = vmatpush2.msra.mxu0 0.0
    %1581 = vmatprep.subr.mxu0 0.0
    %1582 = vmatpush2.msra.mxu0 0.0
    %1583 = vmatprep.subr.mxu0 0.0
    %1584 = vmatpush2.msra.mxu0 0.0
    %1585 = vmatprep.subr.mxu0 0.0
    %1586 = vmatpush2.msra.mxu0 0.0
    %1587 = vmatprep.subr.mxu0 0.0
    %1588 = vmatpush2.msra.mxu0 0.0
    %1589 = vmatprep.subr.mxu0 0.0
    %1590 = vmatpush2.msra.mxu0 0.0
    %1591 = vmatprep.subr.mxu0 0.0
    %1592 = vmatpush2.msra.mxu0 0.0
    %1593 = vmatprep.subr.mxu0 0.0
    %1594 = vmatpush2.msra.mxu0 0.0
    %1595 = vmatprep.mubr.f32.mxu0 0.0
    %1596 = vmatmul.mubr.f32.gmra.mxu0 %v1524
    %v1597 = vpop.f32.mrf.mxu0
    %v1598 = vadd.f32 0.0, %v1597
    %v1599 = vpop.f32.mrf.mxu0
    %1600 = vmatprep.mubr.f32.mxu0 0.0
    %1601 = vmatmul.mubr.f32.gmra.mxu0 %v1526
    %v1602 = vpop.f32.mrf.mxu0
    %v1603 = vadd.f32 0.0, %v1602
    %v1604 = vpop.f32.mrf.mxu0
    %1605 = vdwg.mxu0
    %1607 = vrot.lane.b32.xlu0 %v466, 64
    %v1608 = vpop.permute.xlu0 %1607
    %v1611 = vsel %vm1228, %v1249, 0
    %1613 = vmatprep.subr.mxu0 0.0
    %1614 = vmatpush1.msra.mxu0 0.0
    %1615 = vmatprep.subr.mxu0 0.0
    %1616 = vmatpush1.msra.mxu0 0.0
    %1617 = vmatprep.subr.mxu0 0.0
    %1618 = vmatpush1.msra.mxu0 0.0
    %1619 = vmatprep.subr.mxu0 0.0
    %1620 = vmatpush1.msra.mxu0 0.0
    %1621 = vmatprep.subr.mxu0 0.0
    %1622 = vmatpush1.msra.mxu0 0.0
    %1623 = vmatprep.subr.mxu0 0.0
    %1624 = vmatpush1.msra.mxu0 0.0
    %1625 = vmatprep.subr.mxu0 0.0
    %1626 = vmatpush1.msra.mxu0 0.0
    %1627 = vmatprep.subr.mxu0 0.0
    %1628 = vmatpush1.msra.mxu0 0.0
    %1629 = vmatprep.subr.mxu0 0.0
    %1630 = vmatpush1.msra.mxu0 0.0
    %1631 = vmatprep.subr.mxu0 0.0
    %1632 = vmatpush1.msra.mxu0 0.0
    %1633 = vmatprep.subr.mxu0 0.0
    %1634 = vmatpush1.msra.mxu0 0.0
    %1635 = vmatprep.subr.mxu0 0.0
    %1636 = vmatpush1.msra.mxu0 0.0
    %1637 = vmatprep.subr.mxu0 0.0
    %1638 = vmatpush1.msra.mxu0 0.0
    %1639 = vmatprep.subr.mxu0 0.0
    %1640 = vmatpush1.msra.mxu0 0.0
    %1641 = vmatprep.subr.mxu0 0.0
    %1642 = vmatpush1.msra.mxu0 0.0
    %1643 = vmatprep.subr.mxu0 0.0
    %1644 = vmatpush1.msra.mxu0 %v1608
    %1645 = vmatprep.subr.mxu0 0.0
    %1646 = vmatpush2.msra.mxu0 0.0
    %1647 = vmatprep.subr.mxu0 0.0
    %1648 = vmatpush2.msra.mxu0 0.0
    %1649 = vmatprep.subr.mxu0 0.0
    %1650 = vmatpush2.msra.mxu0 0.0
    %1651 = vmatprep.subr.mxu0 0.0
    %1652 = vmatpush2.msra.mxu0 0.0
    %1653 = vmatprep.subr.mxu0 0.0
    %1654 = vmatpush2.msra.mxu0 0.0
    %1655 = vmatprep.subr.mxu0 0.0
    %1656 = vmatpush2.msra.mxu0 0.0
    %1657 = vmatprep.subr.mxu0 0.0
    %1658 = vmatpush2.msra.mxu0 0.0
    %1659 = vmatprep.subr.mxu0 0.0
    %1660 = vmatpush2.msra.mxu0 0.0
    %1661 = vmatprep.subr.mxu0 0.0
    %1662 = vmatpush2.msra.mxu0 0.0
    %1663 = vmatprep.subr.mxu0 0.0
    %1664 = vmatpush2.msra.mxu0 0.0
    %1665 = vmatprep.subr.mxu0 0.0
    %1666 = vmatpush2.msra.mxu0 0.0
    %1667 = vmatprep.subr.mxu0 0.0
    %1668 = vmatpush2.msra.mxu0 0.0
    %1669 = vmatprep.subr.mxu0 0.0
    %1670 = vmatpush2.msra.mxu0 0.0
    %1671 = vmatprep.subr.mxu0 0.0
    %1672 = vmatpush2.msra.mxu0 0.0
    %1673 = vmatprep.subr.mxu0 0.0
    %1674 = vmatpush2.msra.mxu0 0.0
    %1675 = vmatprep.subr.mxu0 0.0
    %1676 = vmatpush2.msra.mxu0 0.0
    %1677 = vmatprep.mubr.f32.mxu0 0.0
    %1678 = vmatmul.mubr.f32.gmra.mxu0 %v1611
    %v1679 = vpop.f32.mrf.mxu0
    %v1680 = vadd.f32 %v1598, %v1679
    %v1681 = vpop.f32.mrf.mxu0
    %1682 = vdwg.mxu0
    %1684 = vrot.lane.b32.xlu0 %v467, 64
    %v1685 = vpop.permute.xlu0 %1684
    %v1688 = vsel %vm1228, %v1250, 0
    %1690 = vmatprep.subr.mxu0 0.0
    %1691 = vmatpush1.msra.mxu0 0.0
    %1692 = vmatprep.subr.mxu0 0.0
    %1693 = vmatpush1.msra.mxu0 0.0
    %1694 = vmatprep.subr.mxu0 0.0
    %1695 = vmatpush1.msra.mxu0 0.0
    %1696 = vmatprep.subr.mxu0 0.0
    %1697 = vmatpush1.msra.mxu0 0.0
    %1698 = vmatprep.subr.mxu0 0.0
    %1699 = vmatpush1.msra.mxu0 0.0
    %1700 = vmatprep.subr.mxu0 0.0
    %1701 = vmatpush1.msra.mxu0 0.0
    %1702 = vmatprep.subr.mxu0 0.0
    %1703 = vmatpush1.msra.mxu0 0.0
    %1704 = vmatprep.subr.mxu0 0.0
    %1705 = vmatpush1.msra.mxu0 0.0
    %1706 = vmatprep.subr.mxu0 0.0
    %1707 = vmatpush1.msra.mxu0 0.0
    %1708 = vmatprep.subr.mxu0 0.0
    %1709 = vmatpush1.msra.mxu0 0.0
    %1710 = vmatprep.subr.mxu0 0.0
    %1711 = vmatpush1.msra.mxu0 0.0
    %1712 = vmatprep.subr.mxu0 0.0
    %1713 = vmatpush1.msra.mxu0 0.0
    %1714 = vmatprep.subr.mxu0 0.0
    %1715 = vmatpush1.msra.mxu0 0.0
    %1716 = vmatprep.subr.mxu0 0.0
    %1717 = vmatpush1.msra.mxu0 0.0
    %1718 = vmatprep.subr.mxu0 0.0
    %1719 = vmatpush1.msra.mxu0 0.0
    %1720 = vmatprep.subr.mxu0 0.0
    %1721 = vmatpush1.msra.mxu0 %v1685
    %1722 = vmatprep.subr.mxu0 0.0
    %1723 = vmatpush2.msra.mxu0 0.0
    %1724 = vmatprep.subr.mxu0 0.0
    %1725 = vmatpush2.msra.mxu0 0.0
    %1726 = vmatprep.subr.mxu0 0.0
    %1727 = vmatpush2.msra.mxu0 0.0
    %1728 = vmatprep.subr.mxu0 0.0
    %1729 = vmatpush2.msra.mxu0 0.0
    %1730 = vmatprep.subr.mxu0 0.0
    %1731 = vmatpush2.msra.mxu0 0.0
    %1732 = vmatprep.subr.mxu0 0.0
    %1733 = vmatpush2.msra.mxu0 0.0
    %1734 = vmatprep.subr.mxu0 0.0
    %1735 = vmatpush2.msra.mxu0 0.0
    %1736 = vmatprep.subr.mxu0 0.0
    %1737 = vmatpush2.msra.mxu0 0.0
    %1738 = vmatprep.subr.mxu0 0.0
    %1739 = vmatpush2.msra.mxu0 0.0
    %1740 = vmatprep.subr.mxu0 0.0
    %1741 = vmatpush2.msra.mxu0 0.0
    %1742 = vmatprep.subr.mxu0 0.0
    %1743 = vmatpush2.msra.mxu0 0.0
    %1744 = vmatprep.subr.mxu0 0.0
    %1745 = vmatpush2.msra.mxu0 0.0
    %1746 = vmatprep.subr.mxu0 0.0
    %1747 = vmatpush2.msra.mxu0 0.0
    %1748 = vmatprep.subr.mxu0 0.0
    %1749 = vmatpush2.msra.mxu0 0.0
    %1750 = vmatprep.subr.mxu0 0.0
    %1751 = vmatpush2.msra.mxu0 0.0
    %1752 = vmatprep.subr.mxu0 0.0
    %1753 = vmatpush2.msra.mxu0 0.0
    %1754 = vmatprep.mubr.f32.mxu0 0.0
    %1755 = vmatmul.mubr.f32.gmra.mxu0 %v1688
    %v1756 = vpop.f32.mrf.mxu0
    %v1757 = vadd.f32 %v1603, %v1756
    %v1758 = vpop.f32.mrf.mxu0
    %1759 = vdwg.mxu0
    %v1760 = vadd.f32 %v1680, %v169
    %v1761 = vadd.f32 %v1757, %v170
    %v1762 = vsel %vm182, %v1760, 0.0
    %1763 = vadd.xlane.f32.xlu0 %v1762
    %v1764 = vpop.xlane.xlu0 %1763
    %v1765 = vsel %vm182, %v1761, 0.0
    %1766 = vadd.xlane.f32.xlu0 %v1765
    %v1767 = vpop.xlane.xlu0 %1766
    %v1768 = vrcp.pop 32.0
    %v1769 = vmul.f32 %v1764, %v1768
    %v1770 = vmul.f32 %v1767, %v1768
    %v1771 = vsub.f32 %v1760, %v1769
    %v1772 = vsub.f32 %v1761, %v1770
    %v1773 = vmul.f32 %v1771, %v1771
    %v1774 = vmul.f32 %v1772, %v1772
    %v1775 = vsel %vm182, %v1773, 0.0
    %1776 = vadd.xlane.f32.xlu0 %v1775
    %v1777 = vpop.xlane.xlu0 %1776
    %v1778 = vsel %vm182, %v1774, 0.0
    %1779 = vadd.xlane.f32.xlu0 %v1778
    %v1780 = vpop.xlane.xlu0 %1779
    %v1781 = vmul.f32 %v1777, %v1768
    %v1782 = vmul.f32 %v1780, %v1768
    %v1783 = vadd.f32 %v1781, 1e-05
    %v1784 = vadd.f32 %v1782, 1e-05
    %v1785 = vrsqrt.pop %v1783
    %v1786 = vrsqrt.pop %v1784
    %v1787 = vmul.f32 %v1771, %v1785
    %v1788 = vmul.f32 %v1772, %v1786
    %v1789 = vld [vmem:[%s10] sm:$0x1]
    %v1791 = vlaneseq
    %v1792 = vshrl.u32 %v1791, 7
    %v1793 = vsub.s32 0, %v1792
    %v1794 = vrot.slane %v1789, %v1793
    %v1796 = vmul.f32 %v1787, %v1794
    %v1797 = vmul.f32 %v1788, %v1794
    %v1798 = vld [vmem:[%s11] sm:$0x1]
    %v1800 = vlaneseq
    %v1801 = vshrl.u32 %v1800, 7
    %v1802 = vsub.s32 0, %v1801
    %v1803 = vrot.slane %v1798, %v1802
    %v1805 = vadd.f32 %v1796, %v1803
    %v1806 = vadd.f32 %v1797, %v1803
    %v1807 = vld [vmem:[%s12] sm:$0xff]
    %v1808 = vld [vmem:[%s12 + $0x8] sm:$0xff]
    %v1809 = vld [vmem:[%s12 + $0x10] sm:$0xff]
    %v1810 = vld [vmem:[%s12 + $0x18] sm:$0xff]
    %v1811 = vld [vmem:[%s13] sm:$0x1]
    %v1813 = vlaneseq
    %v1814 = vshrl.u32 %v1813, 7
    %v1815 = vsub.s32 0, %v1814
    %v1816 = vrot.slane %v1811, %v1815
    %v1819 = vsel %vm182, %v1805, 0
    %v1822 = vsel %vm182, %v1806, 0
    %1824 = vmatprep.subr.mxu0 0.0
    %1825 = vmatpush1.msra.mxu0 0.0
    %1826 = vmatprep.subr.mxu0 0.0
    %1827 = vmatpush1.msra.mxu0 0.0
    %1828 = vmatprep.subr.mxu0 0.0
    %1829 = vmatpush1.msra.mxu0 0.0
    %1830 = vmatprep.subr.mxu0 0.0
    %1831 = vmatpush1.msra.mxu0 0.0
    %1832 = vmatprep.subr.mxu0 0.0
    %1833 = vmatpush1.msra.mxu0 0.0
    %1834 = vmatprep.subr.mxu0 0.0
    %1835 = vmatpush1.msra.mxu0 0.0
    %1836 = vmatprep.subr.mxu0 0.0
    %1837 = vmatpush1.msra.mxu0 0.0
    %1838 = vmatprep.subr.mxu0 0.0
    %1839 = vmatpush1.msra.mxu0 0.0
    %1840 = vmatprep.subr.mxu0 0.0
    %1841 = vmatpush1.msra.mxu0 0.0
    %1842 = vmatprep.subr.mxu0 0.0
    %1843 = vmatpush1.msra.mxu0 0.0
    %1844 = vmatprep.subr.mxu0 0.0
    %1845 = vmatpush1.msra.mxu0 0.0
    %1846 = vmatprep.subr.mxu0 0.0
    %1847 = vmatpush1.msra.mxu0 0.0
    %1848 = vmatprep.subr.mxu0 0.0
    %1849 = vmatpush1.msra.mxu0 %v1810
    %1850 = vmatprep.subr.mxu0 0.0
    %1851 = vmatpush1.msra.mxu0 %v1809
    %1852 = vmatprep.subr.mxu0 0.0
    %1853 = vmatpush1.msra.mxu0 %v1808
    %1854 = vmatprep.subr.mxu0 0.0
    %1855 = vmatpush1.msra.mxu0 %v1807
    %1856 = vmatprep.subr.mxu0 0.0
    %1857 = vmatpush2.msra.mxu0 0.0
    %1858 = vmatprep.subr.mxu0 0.0
    %1859 = vmatpush2.msra.mxu0 0.0
    %1860 = vmatprep.subr.mxu0 0.0
    %1861 = vmatpush2.msra.mxu0 0.0
    %1862 = vmatprep.subr.mxu0 0.0
    %1863 = vmatpush2.msra.mxu0 0.0
    %1864 = vmatprep.subr.mxu0 0.0
    %1865 = vmatpush2.msra.mxu0 0.0
    %1866 = vmatprep.subr.mxu0 0.0
    %1867 = vmatpush2.msra.mxu0 0.0
    %1868 = vmatprep.subr.mxu0 0.0
    %1869 = vmatpush2.msra.mxu0 0.0
    %1870 = vmatprep.subr.mxu0 0.0
    %1871 = vmatpush2.msra.mxu0 0.0
    %1872 = vmatprep.subr.mxu0 0.0
    %1873 = vmatpush2.msra.mxu0 0.0
    %1874 = vmatprep.subr.mxu0 0.0
    %1875 = vmatpush2.msra.mxu0 0.0
    %1876 = vmatprep.subr.mxu0 0.0
    %1877 = vmatpush2.msra.mxu0 0.0
    %1878 = vmatprep.subr.mxu0 0.0
    %1879 = vmatpush2.msra.mxu0 0.0
    %1880 = vmatprep.subr.mxu0 0.0
    %1881 = vmatpush2.msra.mxu0 0.0
    %1882 = vmatprep.subr.mxu0 0.0
    %1883 = vmatpush2.msra.mxu0 0.0
    %1884 = vmatprep.subr.mxu0 0.0
    %1885 = vmatpush2.msra.mxu0 0.0
    %1886 = vmatprep.subr.mxu0 0.0
    %1887 = vmatpush2.msra.mxu0 0.0
    %1888 = vmatprep.mubr.f32.mxu0 0.0
    %1889 = vmatmul.mubr.f32.gmra.mxu0 %v1819
    %v1890 = vpop.f32.mrf.mxu0
    %v1891 = vadd.f32 %v1816, %v1890
    %v1892 = vpop.f32.mrf.mxu0
    %1893 = vmatprep.mubr.f32.mxu0 0.0
    %1894 = vmatmul.mubr.f32.gmra.mxu0 %v1822
    %v1895 = vpop.f32.mrf.mxu0
    %v1896 = vadd.f32 %v1816, %v1895
    %v1897 = vpop.f32.mrf.mxu0
    %1898 = vdwg.mxu0
    %v1899 = vmax.f32 %v1891, 0.0
    %v1900 = vmax.f32 %v1896, 0.0
    %v1901 = vld [vmem:[#allocation14] sm:$0xff]
    %v1902 = vld [vmem:[#allocation14 + $0x8] sm:$0xff]
    %v1903 = vld [vmem:[#allocation14 + $0x10] sm:$0xff]
    %v1904 = vld [vmem:[#allocation14 + $0x18] sm:$0xff]
    %v1905 = vld [vmem:[%s15] sm:$0x1]
    %v1907 = vlaneseq
    %v1908 = vshrl.u32 %v1907, 7
    %v1909 = vsub.s32 0, %v1908
    %v1910 = vrot.slane %v1905, %v1909
    %v1913 = vsel %vm182, %v1899, 0
    %v1916 = vsel %vm182, %v1900, 0
    %1918 = vmatprep.subr.mxu0 0.0
    %1919 = vmatpush1.msra.mxu0 0.0
    %1920 = vmatprep.subr.mxu0 0.0
    %1921 = vmatpush1.msra.mxu0 0.0
    %1922 = vmatprep.subr.mxu0 0.0
    %1923 = vmatpush1.msra.mxu0 0.0
    %1924 = vmatprep.subr.mxu0 0.0
    %1925 = vmatpush1.msra.mxu0 0.0
    %1926 = vmatprep.subr.mxu0 0.0
    %1927 = vmatpush1.msra.mxu0 0.0
    %1928 = vmatprep.subr.mxu0 0.0
    %1929 = vmatpush1.msra.mxu0 0.0
    %1930 = vmatprep.subr.mxu0 0.0
    %1931 = vmatpush1.msra.mxu0 0.0
    %1932 = vmatprep.subr.mxu0 0.0
    %1933 = vmatpush1.msra.mxu0 0.0
    %1934 = vmatprep.subr.mxu0 0.0
    %1935 = vmatpush1.msra.mxu0 0.0
    %1936 = vmatprep.subr.mxu0 0.0
    %1937 = vmatpush1.msra.mxu0 0.0
    %1938 = vmatprep.subr.mxu0 0.0
    %1939 = vmatpush1.msra.mxu0 0.0
    %1940 = vmatprep.subr.mxu0 0.0
    %1941 = vmatpush1.msra.mxu0 0.0
    %1942 = vmatprep.subr.mxu0 0.0
    %1943 = vmatpush1.msra.mxu0 %v1904
    %1944 = vmatprep.subr.mxu0 0.0
    %1945 = vmatpush1.msra.mxu0 %v1903
    %1946 = vmatprep.subr.mxu0 0.0
    %1947 = vmatpush1.msra.mxu0 %v1902
    %1948 = vmatprep.subr.mxu0 0.0
    %1949 = vmatpush1.msra.mxu0 %v1901
    %1950 = vmatprep.subr.mxu0 0.0
    %1951 = vmatpush2.msra.mxu0 0.0
    %1952 = vmatprep.subr.mxu0 0.0
    %1953 = vmatpush2.msra.mxu0 0.0
    %1954 = vmatprep.subr.mxu0 0.0
    %1955 = vmatpush2.msra.mxu0 0.0
    %1956 = vmatprep.subr.mxu0 0.0
    %1957 = vmatpush2.msra.mxu0 0.0
    %1958 = vmatprep.subr.mxu0 0.0
    %1959 = vmatpush2.msra.mxu0 0.0
    %1960 = vmatprep.subr.mxu0 0.0
    %1961 = vmatpush2.msra.mxu0 0.0
    %1962 = vmatprep.subr.mxu0 0.0
    %1963 = vmatpush2.msra.mxu0 0.0
    %1964 = vmatprep.subr.mxu0 0.0
    %1965 = vmatpush2.msra.mxu0 0.0
    %1966 = vmatprep.subr.mxu0 0.0
    %1967 = vmatpush2.msra.mxu0 0.0
    %1968 = vmatprep.subr.mxu0 0.0
    %1969 = vmatpush2.msra.mxu0 0.0
    %1970 = vmatprep.subr.mxu0 0.0
    %1971 = vmatpush2.msra.mxu0 0.0
    %1972 = vmatprep.subr.mxu0 0.0
    %1973 = vmatpush2.msra.mxu0 0.0
    %1974 = vmatprep.subr.mxu0 0.0
    %1975 = vmatpush2.msra.mxu0 0.0
    %1976 = vmatprep.subr.mxu0 0.0
    %1977 = vmatpush2.msra.mxu0 0.0
    %1978 = vmatprep.subr.mxu0 0.0
    %1979 = vmatpush2.msra.mxu0 0.0
    %1980 = vmatprep.subr.mxu0 0.0
    %1981 = vmatpush2.msra.mxu0 0.0
    %1982 = vmatprep.mubr.f32.mxu0 0.0
    %1983 = vmatmul.mubr.f32.gmra.mxu0 %v1913
    %v1984 = vpop.f32.mrf.mxu0
    %v1985 = vadd.f32 %v1910, %v1984
    %v1986 = vpop.f32.mrf.mxu0
    %1987 = vmatprep.mubr.f32.mxu0 0.0
    %1988 = vmatmul.mubr.f32.gmra.mxu0 %v1916
    %v1989 = vpop.f32.mrf.mxu0
    %v1990 = vadd.f32 %v1910, %v1989
    %v1991 = vpop.f32.mrf.mxu0
    %1992 = vdwg.mxu0
    %v1993 = vadd.f32 %v1985, %v1805
    %v1994 = vadd.f32 %v1990, %v1806
    %v1995 = vsel %vm182, %v1993, 0.0
    %1996 = vadd.xlane.f32.xlu0 %v1995
    %v1997 = vpop.xlane.xlu0 %1996
    %v1998 = vsel %vm182, %v1994, 0.0
    %1999 = vadd.xlane.f32.xlu0 %v1998
    %v2000 = vpop.xlane.xlu0 %1999
    %v2001 = vmul.f32 %v1997, %v1768
    %v2002 = vmul.f32 %v2000, %v1768
    %v2003 = vsub.f32 %v1993, %v2001
    %v2004 = vsub.f32 %v1994, %v2002
    %v2005 = vmul.f32 %v2003, %v2003
    %v2006 = vmul.f32 %v2004, %v2004
    %v2007 = vsel %vm182, %v2005, 0.0
    %2008 = vadd.xlane.f32.xlu0 %v2007
    %v2009 = vpop.xlane.xlu0 %2008
    %v2010 = vsel %vm182, %v2006, 0.0
    %2011 = vadd.xlane.f32.xlu0 %v2010
    %v2012 = vpop.xlane.xlu0 %2011
    %v2013 = vmul.f32 %v2009, %v1768
    %v2014 = vmul.f32 %v2012, %v1768
    %v2015 = vadd.f32 %v2013, 1e-05
    %v2016 = vadd.f32 %v2014, 1e-05
    %v2017 = vrsqrt.pop %v2015
    %v2018 = vrsqrt.pop %v2016
    %v2019 = vmul.f32 %v2003, %v2017
    %v2020 = vmul.f32 %v2004, %v2018
    %v2021 = vld [vmem:[%s16] sm:$0x1]
    %v2023 = vlaneseq
    %v2024 = vshrl.u32 %v2023, 7
    %v2025 = vsub.s32 0, %v2024
    %v2026 = vrot.slane %v2021, %v2025
    %v2028 = vmul.f32 %v2019, %v2026
    %v2029 = vmul.f32 %v2020, %v2026
    %v2030 = vld [vmem:[%s17] sm:$0x1]
    %v2032 = vlaneseq
    %v2033 = vshrl.u32 %v2032, 7
    %v2034 = vsub.s32 0, %v2033
    %v2035 = vrot.slane %v2030, %v2034
    %v2037 = vadd.f32 %v2028, %v2035
    %v2038 = vadd.f32 %v2029, %v2035
    %v2039 = vld [vmem:[%s3] sm:$0x1]
    %v2040 = vld [vmem:[%s3 + $0x1] sm:$0x1]
    %v2041 = vsub.s32 %v2039, 1
    %v2042 = vsub.s32 %v2040, 1
    %v2043 = vlaneseq
    %v2044 = vshrl.u32 %v2043, 7
    %v2045 = vsub.s32 0, %v2044
    %v2046 = vrot.slane %v2041, %v2045
    %v2047 = vlaneseq
    %v2048 = vshrl.u32 %v2047, 7
    %v2049 = vsub.s32 0, %v2048
    %v2050 = vrot.slane %v2042, %v2049
    %vm2051 = vcmp.eq.s32.totalorder %v1224, %v2046
    %vm2052 = vcmp.eq.s32.totalorder %v1224, %v2050
    %v2053 = vsel %vm2051, 1, 0
    %v2054 = vsel %vm2052, 1, 0
    %v2055 = vcvt.s32.f32 %v2053
    %v2056 = vcvt.s32.f32 %v2054
    %2058 = vset.pattern.permute.xlu0 0
    %2059 = vperm.xlu0 %2058, %v2055
    %v2060 = vpop.permute.xlu0 %2059
    %2063 = vset.pattern.permute.xlu0 0
    %2064 = vperm.xlu0 %2063, %v2056
    %v2065 = vpop.permute.xlu0 %2064
    %v2067 = vmul.f32 %v2037, %v2060
    %v2068 = vmul.f32 %v2038, %v2065
    %v2069 = vsel %vm182, %v2067, 0.0
    %v2070 = vrot.slane %v2069, 4
    %v2071 = vadd.f32 %v2069, %v2070
    %v2072 = vrot.slane %v2071, 2
    %v2073 = vadd.f32 %v2071, %v2072
    %v2074 = vrot.slane %v2073, 1
    %v2075 = vadd.f32 %v2073, %v2074
    %v2076 = vsel %vm182, %v2068, 0.0
    %v2077 = vrot.slane %v2076, 4
    %v2078 = vadd.f32 %v2076, %v2077
    %v2079 = vrot.slane %v2078, 2
    %v2080 = vadd.f32 %v2078, %v2079
    %v2081 = vrot.slane %v2080, 1
    %v2082 = vadd.f32 %v2080, %v2081
    %vm2083 = vcmask 253952
    %2084 = vst.msk [vmem:[#allocation16] sm:$0x1] %vm2083, %v2075
    %2085 = vst.msk [vmem:[#allocation16 + $0x1] sm:$0x1] %vm2083, %v2082
    // Predicated region
    $region106: #{tpu_custom_call.1} parent=1 // pred_check
      _
    $region107: #{tpu_custom_call.1} parent=1 // pred_check_branch
      %2087 = sbr.rel (0) target = $region109
    $region108: #{tpu_custom_call.1} parent=1 // pred_region
      %s2089 = ssub.s32 32, 32
      %2090 = vsyncadd [#allocation4], %s2089
      %s2091 = sshll.u32 [#allocation16], 4
      %s2092 = int_to_ptr.vmem [resolvable:$true] %s2091
      %2097 = dma.vmem_to_hbm [thread:$0]  %s2092, 32, %s18, [#allocation4], 16, 16, 1
    $region109: #{tpu_custom_call.1} parent=1 // pred_fallthru
      _
    // Predicated region
    $region110: #{tpu_custom_call.1} parent=1 // pred_check
      _
    $region111: #{tpu_custom_call.1} parent=1 // pred_check_branch
      %2099 = sbr.rel (0) target = $region113
    $region112: #{tpu_custom_call.1} parent=1 // pred_region
      %2100 = dma.done [#allocation4], 32
    $region113: #{tpu_custom_call.1} parent=1 // pred_fallthru
      _
    %2101 = vsyncpa [#allocation3], 1
    %2102 = vsyncpa [#allocation6], 1
    %2103 = vsyncpa [#allocation9], 1
    %2104 = vsyncpa [#allocation12], 1
    %2105 = vsyncpa [#allocation15], 1
    %2106 = vsyncpa [#allocation4], 1

</llo_original>
